<compile_context>
chip_gen: v5e
topology: v5e:2x2
jax: 0.10.0
libtpu: 0.0.40
codegen_flags: <defaults>
</compile_context>

<pallas_src>
import functools

import jax
import jax.numpy as jnp
from jax import lax
from jax.experimental import pallas as pl
from jax.experimental.pallas import tpu as pltpu


def _round_up(x, m):
    return (x + m - 1) // m * m


# ----------------------------------------------------------------------------
# Chip detection (eager, with safe fallbacks) -> VMEM budget & TC count.
# ----------------------------------------------------------------------------
def _detect_vmem_bytes():
    try:
        return int(pltpu.get_tpu_info().vmem_capacity_bytes)
    except Exception:
        return 64 * 1024 * 1024          # conservative (v7x-sized) fallback


def _detect_num_tensorcores():
    try:
        kind = jax.devices()[0].device_kind.lower()
        if "v7" in kind:
            return 2
    except Exception:
        pass
    return 1


_VMEM_PHYS = _detect_vmem_bytes()
# 96 MiB of scoped VMEM on 128-MiB chips (v5e/v6e), 48 MiB on 64-MiB chips (v7x).
_VMEM_LIMIT = 96 * 1024 * 1024 if _VMEM_PHYS >= 120 * 1024 * 1024 else 48 * 1024 * 1024
_NUM_TC = _detect_num_tensorcores()


def _single_buffered_spec(block_shape, index_map):
    """W_hh is grid-invariant -> single buffer (no re-DMA, half the VMEM)."""
    try:
        return pl.BlockSpec(block_shape, index_map, pipeline_mode=pl.Buffered(1))
    except Exception:
        return pl.BlockSpec(block_shape, index_map)


# ----------------------------------------------------------------------------
# Tiled linear kernel: out = x @ w + b   (bf16 inputs, f32 accumulate/output).
# Used for the hoisted LSTM input projection and the vocabulary projection.
# ----------------------------------------------------------------------------
def _linear_kernel(x_ref, w_ref, b_ref, o_ref):
    o_ref[...] = jnp.dot(x_ref[...], w_ref[...],
                         preferred_element_type=jnp.float32) + b_ref[...]


def _pick_linear_tiles(N, K, C, budget):
    tm = 512
    while tm > 128 and C % tm:
        tm //= 2
    n8 = _round_up(N, 8)
    if n8 <= 512:
        return n8, tm
    tn = 128
    for cand in (1024, 512, 256):   # large row tiles -> fewer weight re-reads
        need = 2 * (cand * K * 2 + K * tm * 2 + cand * tm * 4 + tm * 4)
        if need <= budget:
            tn = cand
            break
    return tn, tm


def tiled_linear(x2d, w_t, bias, *, budget):
    """x2d: (N, K); w_t: (K, C) bf16, C % 128 == 0; bias: (1, C) f32."""
    x2d = x2d.astype(jnp.bfloat16)           # cast outside the kernel (half DMA)
    N, K = x2d.shape
    Kw, C = w_t.shape
    assert K == Kw and C % 128 == 0

    tn, tm = _pick_linear_tiles(N, K, C, budget)
    n_pad = _round_up(N, tn)
    if n_pad != N:
        x2d = jnp.pad(x2d, ((0, n_pad - N), (0, 0)))

    out = pl.pallas_call(
        _linear_kernel,
        out_shape=jax.ShapeDtypeStruct((n_pad, C), jnp.float32),
        grid_spec=pltpu.PrefetchScalarGridSpec(
            num_scalar_prefetch=0,
            grid=(n_pad // tn, C // tm),
            in_specs=[
                pl.BlockSpec((tn, K), lambda n, m: (n, 0)),
                pl.BlockSpec((K, tm), lambda n, m: (0, m)),
                pl.BlockSpec((1, tm), lambda n, m: (0, m)),
            ],
            out_specs=pl.BlockSpec((tn, tm), lambda n, m: (n, m)),
        ),
        compiler_params=pltpu.CompilerParams(
            dimension_semantics=("parallel", "parallel"),
            vmem_limit_bytes=_VMEM_LIMIT),
    )(x2d, w_t, bias)
    return out[:N] if n_pad != N else out


# ----------------------------------------------------------------------------
# LSTM recurrent kernel.
#   Grid: (batch_tiles ['parallel'], time_chunks ['arbitrary']).
#   Each grid step runs t_blk time steps (unrolled); h/c state live in VMEM
#   scratch across time chunks.  x-gates are precomputed, so the only per-step
#   matmul is h @ W_hh^T (bf16 MXU, f32 accumulation).
# ----------------------------------------------------------------------------
def _sigmoid_via_tanh(x):
    # sigmoid(x) == 0.5 * (tanh(0.5 * x) + 1): one EUP op instead of exp+recip.
    return 0.5 * (jnp.tanh(0.5 * x) + 1.0)


def _lstm_recurrent_kernel(xg_ref, whh_ref, h_out_ref, h_state, c_state,
                           *, t_blk, hidden):
    @pl.when(pl.program_id(1) == 0)
    def _():
        h_state[...] = jnp.zeros_like(h_state)
        c_state[...] = jnp.zeros_like(c_state)

    H = hidden  # per-gate column width == h width

    def step(s, carry):
        gates = xg_ref[s] + jnp.dot(h_state[...], whh_ref[...],
                                    preferred_element_type=jnp.float32)
        i = _sigmoid_via_tanh(gates[:, 0 * H:1 * H])
        f = _sigmoid_via_tanh(gates[:, 1 * H:2 * H])
        g = jnp.tanh(gates[:, 2 * H:3 * H])
        o = _sigmoid_via_tanh(gates[:, 3 * H:4 * H])
        c = f * c_state[...] + i * g                     # f32 cell state
        h = (o * jnp.tanh(c)).astype(jnp.bfloat16)       # bf16 hidden state
        c_state[...] = c
        h_state[...] = h
        h_out_ref[s] = h
        return carry

    lax.fori_loop(0, t_blk, step, 0, unroll=True)


def _pick_time_block(T, b_tile, G4, Hw, budget):
    # xg block (f32, double-buffered) + h_out block (bf16, double-buffered)
    per_t = b_tile * (2 * G4 * 4 + 2 * Hw * 2)
    # single-buffered W_hh + h/c scratch
    fixed = Hw * G4 * 2 + b_tile * Hw * 6
    t_cap = max(1, min(16, (budget - fixed) // per_t))
    return max(1, min(T, t_cap))


def lstm_layer(x, w_ih_t, w_hh_t, bias, b_tile):
    """One LSTM layer over the whole sequence.

    x: (T, Bp, In) f32/bf16;  w_ih_t: (In, G4) bf16;  w_hh_t: (Hw, G4) bf16;
    bias: (1, G4) f32 (b_ih + b_hh).  Returns hidden states (T, Bp, Hw) bf16.
    """
    T, Bp, In = x.shape
    Hw, G4 = w_hh_t.shape
    budget = int(_VMEM_LIMIT * 0.75)

    # (1) Time blocking: pad the *input* (In-wide) in time, not the 4Hw-wide xg.
    t_blk = _pick_time_block(T, b_tile, G4, Hw, budget)
    t_pad = _round_up(T, t_blk)
    if t_pad != T:
        # Padded steps run after all real steps; their outputs are sliced off.
        x = jnp.pad(x, ((0, t_pad - T), (0, 0), (0, 0)))

    # (2) Hoisted input projection: one MXU-saturating GEMM over t_pad*Bp rows.
    xg = tiled_linear(x.reshape(t_pad * Bp, In), w_ih_t, bias, budget=budget)
    xg = xg.reshape(t_pad, Bp, G4)                        # f32 gate pre-acts

    # (3) Sequential recurrence.
    n_b = Bp // b_tile
    n_t = t_pad // t_blk
    kernel = functools.partial(_lstm_recurrent_kernel, t_blk=t_blk, hidden=Hw)
    h = pl.pallas_call(
        kernel,
        out_shape=jax.ShapeDtypeStruct((t_pad, Bp, Hw), jnp.bfloat16),
        grid_spec=pltpu.PrefetchScalarGridSpec(
            num_scalar_prefetch=0,
            grid=(n_b, n_t),
            in_specs=[
                pl.BlockSpec((t_blk, b_tile, G4), lambda b, t: (t, b, 0)),
                _single_buffered_spec((Hw, G4), lambda b, t: (0, 0)),
            ],
            out_specs=pl.BlockSpec((t_blk, b_tile, Hw), lambda b, t: (t, b, 0)),
            scratch_shapes=[
                pltpu.VMEM((b_tile, Hw), jnp.bfloat16),   # h state (feeds MXU)
                pltpu.VMEM((b_tile, Hw), jnp.float32),    # c state (f32)
            ],
        ),
        compiler_params=pltpu.CompilerParams(
            dimension_semantics=("parallel", "arbitrary"),
            vmem_limit_bytes=_VMEM_LIMIT),
    )(xg, w_hh_t)
    return h[:T] if t_pad != T else h


# ----------------------------------------------------------------------------
# Batch padding / tiling policy.
# ----------------------------------------------------------------------------
def _batch_pad_and_tile(B):
    Bp = _round_up(B, 8)
    if Bp <= 128:
        b_tile = Bp
        if _NUM_TC > 1 and Bp >= 16 and (Bp // 2) % 8 == 0:
            b_tile = Bp // 2          # let both v7x TensorCores run the recurrence
        return Bp, b_tile
    # Large batches: 64-row tiles instead of forcing 128-multiples.
    return _round_up(B, 64), 64


# ----------------------------------------------------------------------------
# Full RNN forward (glue in plain JAX: embedding gather, concat, pad/slice).
# ----------------------------------------------------------------------------
@jax.jit
def rnn_forward(params, features, captions):
    embed = params["embed"]
    V = embed.shape[0]
    B = features.shape[0]

    # Embedding lookup (gather) + dropout (identity in eval mode).
    emb = jnp.take(embed, captions, axis=0)                    # (T, B, E)
    x = jnp.concatenate([features[None, :, :], emb], axis=0)   # (T+1, B, E)
    Tt = x.shape[0]

    Bp, b_tile = _batch_pad_and_tile(B)
    if Bp != B:
        x = jnp.pad(x, ((0, 0), (0, Bp - B), (0, 0)))

    for layer in params["lstm"]:
        x = lstm_layer(x, layer["w_ih_t"], layer["w_hh_t"], layer["bias"],
                       b_tile)

    Hw = x.shape[-1]
    out = tiled_linear(x.reshape(Tt * Bp, Hw), params["lin_w_t"],
                       params["lin_b"], budget=int(_VMEM_LIMIT * 0.75))
    Vp = out.shape[-1]
    return out.reshape(Tt, Bp, Vp)[:, :B, :V]                  # (T+1, B, V) f32


# ----------------------------------------------------------------------------
# Parameter construction (PyTorch-equivalent init, then pad + cast for TPU).
# Gate layout (PyTorch order [i | f | g | o]):
#   H >= 128: each gate padded to Hw = round_up(H, 128)  (lane-aligned slices)
#   H <  128: gates packed with width Hw = round_up(H, 8), total padded to 128
# ----------------------------------------------------------------------------
def _gate_layout(H):
    Hw = _round_up(H, 128) if H >= 128 else _round_up(H, 8)
    return Hw, _round_up(4 * Hw, 128)


def _pack_gates(w, H, Hw, G4):
    """(rows, 4H) -> (rows, G4), gate k -> columns [k*Hw, k*Hw + H)."""
    rows = w.shape[0]
    out = jnp.zeros((rows, G4), w.dtype)
    for k in range(4):
        out = out.at[:, k * Hw:k * Hw + H].set(w[:, k * H:(k + 1) * H])
    return out


def _pad_rows(w, rows_pad):
    return jnp.pad(w, ((0, rows_pad - w.shape[0]), (0, 0)))


def init_params(key, embedding_size, hidden_size, vocabulary_size, num_layers):
    E, H, V = embedding_size, hidden_size, vocabulary_size
    Hw, G4 = _gate_layout(H)
    Vp = _round_up(V, 128)
    keys = jax.random.split(key, 3 + 4 * num_layers)
    k = 1.0 / jnp.sqrt(hidden_size)

    params = {}
    # nn.Embedding default init: N(0, 1)
    params["embed"] = jax.random.normal(keys[0], (V, E), jnp.float32)

    # nn.LSTM: per-layer W_ih (4H, In), W_hh (4H, H), b_ih, b_hh ~ U(-k, k).
    layers = []
    for l in range(num_layers):
        in_sz = E if l == 0 else H
        in_pad = E if l == 0 else Hw
        kw = keys[3 + 4 * l: 3 + 4 * (l + 1)]
        w_ih = jax.random.uniform(kw[0], (4 * H, in_sz), jnp.float32, -k, k)
        w_hh = jax.random.uniform(kw[1], (4 * H, H), jnp.float32, -k, k)
        b_ih = jax.random.uniform(kw[2], (4 * H,), jnp.float32, -k, k)
        b_hh = jax.random.uniform(kw[3], (4 * H,), jnp.float32, -k, k)

        w_ih_t = _pad_rows(_pack_gates(w_ih.T, H, Hw, G4), in_pad)   # (In, G4)
        w_hh_t = _pad_rows(_pack_gates(w_hh.T, H, Hw, G4), Hw)       # (Hw, G4)
        bias = _pack_gates((b_ih + b_hh)[None, :], H, Hw, G4)        # (1, G4)

        layers.append({
            "w_ih_t": w_ih_t.astype(jnp.bfloat16),
            "w_hh_t": w_hh_t.astype(jnp.bfloat16),
            "bias": bias.astype(jnp.float32),
        })
    params["lstm"] = layers

    # nn.Linear(hidden, vocab): U(-k, k); pad H rows / V cols.
    lin_w = jax.random.uniform(keys[1], (V, H), jnp.float32, -k, k)
    lin_b = jax.random.uniform(keys[2], (V,), jnp.float32, -k, k)
    lin_w_t = jnp.zeros((Hw, Vp), jnp.float32).at[:H, :V].set(lin_w.T)
    lin_b_p = jnp.zeros((1, Vp), jnp.float32).at[0, :V].set(lin_b)
    params["lin_w_t"] = lin_w_t.astype(jnp.bfloat16)
    params["lin_b"] = lin_b_p
    return params


# ----------------------------------------------------------------------------
# Pure-JAX reference (same padded params / same bf16 matmul inputs) for a
# correctness check of the Pallas tiling & recurrence mechanics.
# ----------------------------------------------------------------------------
def _rnn_forward_ref(params, features, captions):
    embed = params["embed"]
    V = embed.shape[0]
    emb = jnp.take(embed, captions, axis=0)
    x = jnp.concatenate([features[None, :, :], emb], axis=0)   # (T, B, E)

    for layer in params["lstm"]:
        wih, whh, b = layer["w_ih_t"], layer["w_hh_t"], layer["bias"]
        Hw = whh.shape[0]
        xg = jnp.dot(x.astype(jnp.bfloat16), wih,
                     preferred_element_type=jnp.float32) + b   # (T, B, G4)

        def step(carry, g):
            h, c = carry
            gates = g + jnp.dot(h.astype(jnp.bfloat16), whh,
                                preferred_element_type=jnp.float32)
            i = jax.nn.sigmoid(gates[:, 0 * Hw:1 * Hw])
            f = jax.nn.sigmoid(gates[:, 1 * Hw:2 * Hw])
            gg = jnp.tanh(gates[:, 2 * Hw:3 * Hw])
            o = jax.nn.sigmoid(gates[:, 3 * Hw:4 * Hw])
            c = f * c + i * gg
            h = o * jnp.tanh(c)
            return (h, c), h

        h0 = jnp.zeros((x.shape[1], Hw), jnp.float32)
        _, x = lax.scan(step, (h0, h0), xg)

    T, B, Hw = x.shape
    out = (jnp.dot(x.reshape(T * B, Hw).astype(jnp.bfloat16), params["lin_w_t"],
                   preferred_element_type=jnp.float32) + params["lin_b"])
    return out.reshape(T, B, -1)[:, :, :V]


if __name__ == "__main__":
    # Small shapes consistent with the module.
    embedding_size = 16
    hidden_size = 32
    vocabulary_size = 50
    num_layers = 2
    seq_len = 8
    batch = 2

    key = jax.random.PRNGKey(0)
    kp, kf, kc = jax.random.split(key, 3)

    params = init_params(kp, embedding_size, hidden_size,
                         vocabulary_size, num_layers)
    features = jax.random.normal(kf, (batch, embedding_size), jnp.float32)
    captions = jax.random.randint(kc, (seq_len, batch), 0, vocabulary_size,
                                  dtype=jnp.int32)

    out = rnn_forward(params, features, captions)
    out = jax.block_until_ready(out)

    assert out.shape == (seq_len + 1, batch, vocabulary_size), out.shape
    assert out.dtype == jnp.float32

    ref = jax.block_until_ready(_rnn_forward_ref(params, features, captions))
    max_err = float(jnp.max(jnp.abs(out - ref)))
    assert max_err < 2e-2, f"max |err| vs reference = {max_err}"

    print("KERNEL_OK")
</pallas_src>

<mosaic_0001>
module attributes {stable_mosaic.version = 11 : i64} {
  func.func @_linear_kernel(%arg0: i32, %arg1: i32, %arg2: memref<72x16xbf16, #tpu.memory_space<vmem>>, %arg3: memref<16x128xbf16, #tpu.memory_space<vmem>>, %arg4: memref<1x128xf32, #tpu.memory_space<vmem>>, %arg5: memref<72x128xf32, #tpu.memory_space<vmem>>) attributes {dimension_semantics = [#tpu.dimension_semantics<parallel>, #tpu.dimension_semantics<parallel>], iteration_bounds = array<i64: 1, 1>, scalar_prefetch = 0 : i64, scratch_operands = 0 : i64, tpu.core_type = #tpu.core_type<tc>, window_params = [{transform_indices = @transform_0, window_bounds = array<i64: 72, 16>}, {transform_indices = @transform_1, window_bounds = array<i64: 16, 128>}, {transform_indices = @transform_2, window_bounds = array<i64: 1, 128>}, {transform_indices = @transform_3, window_bounds = array<i64: 72, 128>}]} {
    %c0 = arith.constant 0 : index
    %c0_0 = arith.constant 0 : index
    %0 = vector.load %arg2[%c0, %c0_0] : memref<72x16xbf16, #tpu.memory_space<vmem>>, vector<72x16xbf16>
    %c0_1 = arith.constant 0 : index
    %c0_2 = arith.constant 0 : index
    %1 = vector.load %arg3[%c0_1, %c0_2] : memref<16x128xbf16, #tpu.memory_space<vmem>>, vector<16x128xbf16>
    %cst = arith.constant dense<0.000000e+00> : vector<72x128xf32>
    %2 = tpu.matmul %0, %1, %cst {dimension_numbers = #tpu.dot_dimension_numbers<[1], [0], [0], [1], [0, 0, 1, 1], [], []>} : vector<72x16xbf16>, vector<16x128xbf16>, vector<72x128xf32> -> vector<72x128xf32>
    %c0_3 = arith.constant 0 : index
    %c0_4 = arith.constant 0 : index
    %3 = vector.load %arg4[%c0_3, %c0_4] : memref<1x128xf32, #tpu.memory_space<vmem>>, vector<1x128xf32>
    %4 = vector.broadcast %3 : vector<1x128xf32> to vector<72x128xf32>
    %5 = arith.addf %2, %4 : vector<72x128xf32>
    %c0_5 = arith.constant 0 : index
    %c0_6 = arith.constant 0 : index
    %6 = vector.load %arg5[%c0_5, %c0_6] : memref<72x128xf32, #tpu.memory_space<vmem>>, vector<72x128xf32>
    tpu.vector_store %arg5[%c0_5, %c0_6], %5 {strides = array<i32>} : memref<72x128xf32, #tpu.memory_space<vmem>>, vector<72x128xf32>,
    return
  }
  func.func @transform_0(%arg0: i32, %arg1: i32) -> (i32, i32) {
    %c0_i32 = arith.constant 0 : i32
    %c0_i32_0 = arith.constant 0 : i32
    return %arg0, %c0_i32 : i32, i32
  }
  func.func @transform_1(%arg0: i32, %arg1: i32) -> (i32, i32) {
    %c0_i32 = arith.constant 0 : i32
    %c0_i32_0 = arith.constant 0 : i32
    return %c0_i32, %arg1 : i32, i32
  }
  func.func @transform_2(%arg0: i32, %arg1: i32) -> (i32, i32) {
    %c0_i32 = arith.constant 0 : i32
    %c0_i32_0 = arith.constant 0 : i32
    return %c0_i32, %arg1 : i32, i32
  }
  func.func @transform_3(%arg0: i32, %arg1: i32) -> (i32, i32) {
    %c0_i32 = arith.constant 0 : i32
    return %arg0, %arg1 : i32, i32
  }
}

module attributes {stable_mosaic.version = 11 : i64} {
  func.func @_lstm_recurrent_kernel(%arg0: i32, %arg1: i32, %arg2: memref<9x8x128xf32, #tpu.memory_space<vmem>>, %arg3: memref<32x128xbf16, #tpu.memory_space<vmem>>, %arg4: memref<9x8x32xbf16, #tpu.memory_space<vmem>>, %arg5: memref<8x32xbf16, #tpu.memory_space<vmem>>, %arg6: memref<8x32xf32, #tpu.memory_space<vmem>>) attributes {dimension_semantics = [#tpu.dimension_semantics<parallel>, #tpu.dimension_semantics<arbitrary>], iteration_bounds = array<i64: 1, 1>, scalar_prefetch = 0 : i64, scratch_operands = 2 : i64, tpu.core_type = #tpu.core_type<tc>, window_params = [{transform_indices = @transform_0, window_bounds = array<i64: 9, 8, 128>}, {pipeline_mode = #tpu.pipeline_mode<synchronous>, transform_indices = @transform_1, window_bounds = array<i64: 32, 128>}, {transform_indices = @transform_2, window_bounds = array<i64: 9, 8, 32>}]} {
    %c0_i32 = arith.constant 0 : i32
    %0 = arith.cmpi eq, %arg1, %c0_i32 : i32
    %1 = arith.extui %0 : i1 to i32
    %c0_i32_0 = arith.constant 0 : i32
    %2 = arith.cmpi ne, %1, %c0_i32_0 : i32
    scf.if %2 {
      %cst_216 = arith.constant 0.000000e+00 : bf16
      %417 = vector.broadcast %cst_216 : bf16 to vector<8x32xbf16>
      %c0_217 = arith.constant 0 : index
      %c0_218 = arith.constant 0 : index
      %418 = vector.load %arg5[%c0_217, %c0_218] : memref<8x32xbf16, #tpu.memory_space<vmem>>, vector<8x32xbf16>
      tpu.vector_store %arg5[%c0_217, %c0_218], %417 {strides = array<i32>} : memref<8x32xbf16, #tpu.memory_space<vmem>>, vector<8x32xbf16>,
      %cst_219 = arith.constant 0.000000e+00 : f32
      %419 = vector.broadcast %cst_219 : f32 to vector<8x32xf32>
      %c0_220 = arith.constant 0 : index
      %c0_221 = arith.constant 0 : index
      %420 = vector.load %arg6[%c0_220, %c0_221] : memref<8x32xf32, #tpu.memory_space<vmem>>, vector<8x32xf32>
      tpu.vector_store %arg6[%c0_220, %c0_221], %419 {strides = array<i32>} : memref<8x32xf32, #tpu.memory_space<vmem>>, vector<8x32xf32>,
    } else {
    }
    %c0_i32_1 = arith.constant 0 : i32
    %3 = arith.index_cast %c0_i32_1 : i32 to index
    %c0 = arith.constant 0 : index
    %c0_2 = arith.constant 0 : index
    %4 = vector.load %arg2[%3, %c0, %c0_2] : memref<9x8x128xf32, #tpu.memory_space<vmem>>, vector<1x8x128xf32>
    %5 = vector.shape_cast %4 : vector<1x8x128xf32> to vector<8x128xf32>
    %c0_3 = arith.constant 0 : index
    %c0_4 = arith.constant 0 : index
    %6 = vector.load %arg5[%c0_3, %c0_4] : memref<8x32xbf16, #tpu.memory_space<vmem>>, vector<8x32xbf16>
    %c0_5 = arith.constant 0 : index
    %c0_6 = arith.constant 0 : index
    %7 = vector.load %arg3[%c0_5, %c0_6] : memref<32x128xbf16, #tpu.memory_space<vmem>>, vector<32x128xbf16>
    %cst = arith.constant dense<0.000000e+00> : vector<8x128xf32>
    %8 = tpu.matmul %6, %7, %cst {dimension_numbers = #tpu.dot_dimension_numbers<[1], [0], [0], [1], [0, 0, 1, 1], [], []>} : vector<8x32xbf16>, vector<32x128xbf16>, vector<8x128xf32> -> vector<8x128xf32>
    %9 = arith.addf %5, %8 : vector<8x128xf32>
    %10 = vector.extract_strided_slice %9 {offsets = [0, 0], sizes = [8, 32], strides = [1, 1]} : vector<8x128xf32> to vector<8x32xf32>
    %cst_7 = arith.constant 5.000000e-01 : f32
    %11 = vector.broadcast %cst_7 : f32 to vector<8x32xf32>
    %12 = arith.mulf %11, %10 : vector<8x32xf32>
    %13 = math.tanh %12 : vector<8x32xf32>
    %cst_8 = arith.constant 1.000000e+00 : f32
    %14 = vector.broadcast %cst_8 : f32 to vector<8x32xf32>
    %15 = arith.addf %13, %14 : vector<8x32xf32>
    %cst_9 = arith.constant 5.000000e-01 : f32
    %16 = vector.broadcast %cst_9 : f32 to vector<8x32xf32>
    %17 = arith.mulf %16, %15 : vector<8x32xf32>
    %18 = vector.extract_strided_slice %9 {offsets = [0, 32], sizes = [8, 32], strides = [1, 1]} : vector<8x128xf32> to vector<8x32xf32>
    %cst_10 = arith.constant 5.000000e-01 : f32
    %19 = vector.broadcast %cst_10 : f32 to vector<8x32xf32>
    %20 = arith.mulf %19, %18 : vector<8x32xf32>
    %21 = math.tanh %20 : vector<8x32xf32>
    %cst_11 = arith.constant 1.000000e+00 : f32
    %22 = vector.broadcast %cst_11 : f32 to vector<8x32xf32>
    %23 = arith.addf %21, %22 : vector<8x32xf32>
    %cst_12 = arith.constant 5.000000e-01 : f32
    %24 = vector.broadcast %cst_12 : f32 to vector<8x32xf32>
    %25 = arith.mulf %24, %23 : vector<8x32xf32>
    %26 = vector.extract_strided_slice %9 {offsets = [0, 64], sizes = [8, 32], strides = [1, 1]} : vector<8x128xf32> to vector<8x32xf32>
    %27 = math.tanh %26 : vector<8x32xf32>
    %28 = vector.extract_strided_slice %9 {offsets = [0, 96], sizes = [8, 32], strides = [1, 1]} : vector<8x128xf32> to vector<8x32xf32>
    %cst_13 = arith.constant 5.000000e-01 : f32
    %29 = vector.broadcast %cst_13 : f32 to vector<8x32xf32>
    %30 = arith.mulf %29, %28 : vector<8x32xf32>
    %31 = math.tanh %30 : vector<8x32xf32>
    %cst_14 = arith.constant 1.000000e+00 : f32
    %32 = vector.broadcast %cst_14 : f32 to vector<8x32xf32>
    %33 = arith.addf %31, %32 : vector<8x32xf32>
    %cst_15 = arith.constant 5.000000e-01 : f32
    %34 = vector.broadcast %cst_15 : f32 to vector<8x32xf32>
    %35 = arith.mulf %34, %33 : vector<8x32xf32>
    %c0_16 = arith.constant 0 : index
    %c0_17 = arith.constant 0 : index
    %36 = vector.load %arg6[%c0_16, %c0_17] : memref<8x32xf32, #tpu.memory_space<vmem>>, vector<8x32xf32>
    %37 = arith.mulf %25, %36 : vector<8x32xf32>
    %38 = arith.mulf %17, %27 : vector<8x32xf32>
    %39 = arith.addf %37, %38 : vector<8x32xf32>
    %40 = math.tanh %39 : vector<8x32xf32>
    %41 = arith.mulf %35, %40 : vector<8x32xf32>
    %42 = arith.truncf %41 : vector<8x32xf32> to vector<8x32xbf16>
    %c0_18 = arith.constant 0 : index
    %c0_19 = arith.constant 0 : index
    %43 = vector.load %arg6[%c0_18, %c0_19] : memref<8x32xf32, #tpu.memory_space<vmem>>, vector<8x32xf32>
    tpu.vector_store %arg6[%c0_18, %c0_19], %39 {strides = array<i32>} : memref<8x32xf32, #tpu.memory_space<vmem>>, vector<8x32xf32>,
    %c0_20 = arith.constant 0 : index
    %c0_21 = arith.constant 0 : index
    %44 = vector.load %arg5[%c0_20, %c0_21] : memref<8x32xbf16, #tpu.memory_space<vmem>>, vector<8x32xbf16>
    tpu.vector_store %arg5[%c0_20, %c0_21], %42 {strides = array<i32>} : memref<8x32xbf16, #tpu.memory_space<vmem>>, vector<8x32xbf16>,
    %45 = arith.index_cast %c0_i32_1 : i32 to index
    %c0_22 = arith.constant 0 : index
    %c0_23 = arith.constant 0 : index
    %46 = vector.load %arg4[%45, %c0_22, %c0_23] : memref<9x8x32xbf16, #tpu.memory_space<vmem>>, vector<1x8x32xbf16>
    %47 = vector.shape_cast %46 : vector<1x8x32xbf16> to vector<8x32xbf16>
    %48 = vector.shape_cast %42 : vector<8x32xbf16> to vector<1x8x32xbf16>
    tpu.vector_store %arg4[%45, %c0_22, %c0_23], %48 {strides = array<i32>} : memref<9x8x32xbf16, #tpu.memory_space<vmem>>, vector<1x8x32xbf16>,
    %c1_i32 = arith.constant 1 : i32
    %49 = arith.index_cast %c1_i32 : i32 to index
    %c0_24 = arith.constant 0 : index
    %c0_25 = arith.constant 0 : index
    %50 = vector.load %arg2[%49, %c0_24, %c0_25] : memref<9x8x128xf32, #tpu.memory_space<vmem>>, vector<1x8x128xf32>
    %51 = vector.shape_cast %50 : vector<1x8x128xf32> to vector<8x128xf32>
    %c0_26 = arith.constant 0 : index
    %c0_27 = arith.constant 0 : index
    %52 = vector.load %arg5[%c0_26, %c0_27] : memref<8x32xbf16, #tpu.memory_space<vmem>>, vector<8x32xbf16>
    %c0_28 = arith.constant 0 : index
    %c0_29 = arith.constant 0 : index
    %53 = vector.load %arg3[%c0_28, %c0_29] : memref<32x128xbf16, #tpu.memory_space<vmem>>, vector<32x128xbf16>
    %cst_30 = arith.constant dense<0.000000e+00> : vector<8x128xf32>
    %54 = tpu.matmul %52, %53, %cst_30 {dimension_numbers = #tpu.dot_dimension_numbers<[1], [0], [0], [1], [0, 0, 1, 1], [], []>} : vector<8x32xbf16>, vector<32x128xbf16>, vector<8x128xf32> -> vector<8x128xf32>
    %55 = arith.addf %51, %54 : vector<8x128xf32>
    %56 = vector.extract_strided_slice %55 {offsets = [0, 0], sizes = [8, 32], strides = [1, 1]} : vector<8x128xf32> to vector<8x32xf32>
    %cst_31 = arith.constant 5.000000e-01 : f32
    %57 = vector.broadcast %cst_31 : f32 to vector<8x32xf32>
    %58 = arith.mulf %57, %56 : vector<8x32xf32>
    %59 = math.tanh %58 : vector<8x32xf32>
    %cst_32 = arith.constant 1.000000e+00 : f32
    %60 = vector.broadcast %cst_32 : f32 to vector<8x32xf32>
    %61 = arith.addf %59, %60 : vector<8x32xf32>
    %cst_33 = arith.constant 5.000000e-01 : f32
    %62 = vector.broadcast %cst_33 : f32 to vector<8x32xf32>
    %63 = arith.mulf %62, %61 : vector<8x32xf32>
    %64 = vector.extract_strided_slice %55 {offsets = [0, 32], sizes = [8, 32], strides = [1, 1]} : vector<8x128xf32> to vector<8x32xf32>
    %cst_34 = arith.constant 5.000000e-01 : f32
    %65 = vector.broadcast %cst_34 : f32 to vector<8x32xf32>
    %66 = arith.mulf %65, %64 : vector<8x32xf32>
    %67 = math.tanh %66 : vector<8x32xf32>
    %cst_35 = arith.constant 1.000000e+00 : f32
    %68 = vector.broadcast %cst_35 : f32 to vector<8x32xf32>
    %69 = arith.addf %67, %68 : vector<8x32xf32>
    %cst_36 = arith.constant 5.000000e-01 : f32
    %70 = vector.broadcast %cst_36 : f32 to vector<8x32xf32>
    %71 = arith.mulf %70, %69 : vector<8x32xf32>
    %72 = vector.extract_strided_slice %55 {offsets = [0, 64], sizes = [8, 32], strides = [1, 1]} : vector<8x128xf32> to vector<8x32xf32>
    %73 = math.tanh %72 : vector<8x32xf32>
    %74 = vector.extract_strided_slice %55 {offsets = [0, 96], sizes = [8, 32], strides = [1, 1]} : vector<8x128xf32> to vector<8x32xf32>
    %cst_37 = arith.constant 5.000000e-01 : f32
    %75 = vector.broadcast %cst_37 : f32 to vector<8x32xf32>
    %76 = arith.mulf %75, %74 : vector<8x32xf32>
    %77 = math.tanh %76 : vector<8x32xf32>
    %cst_38 = arith.constant 1.000000e+00 : f32
    %78 = vector.broadcast %cst_38 : f32 to vector<8x32xf32>
    %79 = arith.addf %77, %78 : vector<8x32xf32>
    %cst_39 = arith.constant 5.000000e-01 : f32
    %80 = vector.broadcast %cst_39 : f32 to vector<8x32xf32>
    %81 = arith.mulf %80, %79 : vector<8x32xf32>
    %c0_40 = arith.constant 0 : index
    %c0_41 = arith.constant 0 : index
    %82 = vector.load %arg6[%c0_40, %c0_41] : memref<8x32xf32, #tpu.memory_space<vmem>>, vector<8x32xf32>
    %83 = arith.mulf %71, %82 : vector<8x32xf32>
    %84 = arith.mulf %63, %73 : vector<8x32xf32>
    %85 = arith.addf %83, %84 : vector<8x32xf32>
    %86 = math.tanh %85 : vector<8x32xf32>
    %87 = arith.mulf %81, %86 : vector<8x32xf32>
    %88 = arith.truncf %87 : vector<8x32xf32> to vector<8x32xbf16>
    %c0_42 = arith.constant 0 : index
    %c0_43 = arith.constant 0 : index
    %89 = vector.load %arg6[%c0_42, %c0_43] : memref<8x32xf32, #tpu.memory_space<vmem>>, vector<8x32xf32>
    tpu.vector_store %arg6[%c0_42, %c0_43], %85 {strides = array<i32>} : memref<8x32xf32, #tpu.memory_space<vmem>>, vector<8x32xf32>,
    %c0_44 = arith.constant 0 : index
    %c0_45 = arith.constant 0 : index
    %90 = vector.load %arg5[%c0_44, %c0_45] : memref<8x32xbf16, #tpu.memory_space<vmem>>, vector<8x32xbf16>
    tpu.vector_store %arg5[%c0_44, %c0_45], %88 {strides = array<i32>} : memref<8x32xbf16, #tpu.memory_space<vmem>>, vector<8x32xbf16>,
    %91 = arith.index_cast %c1_i32 : i32 to index
    %c0_46 = arith.constant 0 : index
    %c0_47 = arith.constant 0 : index
    %92 = vector.load %arg4[%91, %c0_46, %c0_47] : memref<9x8x32xbf16, #tpu.memory_space<vmem>>, vector<1x8x32xbf16>
    %93 = vector.shape_cast %92 : vector<1x8x32xbf16> to vector<8x32xbf16>
    %94 = vector.shape_cast %88 : vector<8x32xbf16> to vector<1x8x32xbf16>
    tpu.vector_store %arg4[%91, %c0_46, %c0_47], %94 {strides = array<i32>} : memref<9x8x32xbf16, #tpu.memory_space<vmem>>, vector<1x8x32xbf16>,
    %c2_i32 = arith.constant 2 : i32
    %95 = arith.index_cast %c2_i32 : i32 to index
    %c0_48 = arith.constant 0 : index
    %c0_49 = arith.constant 0 : index
    %96 = vector.load %arg2[%95, %c0_48, %c0_49] : memref<9x8x128xf32, #tpu.memory_space<vmem>>, vector<1x8x128xf32>
    %97 = vector.shape_cast %96 : vector<1x8x128xf32> to vector<8x128xf32>
    %c0_50 = arith.constant 0 : index
    %c0_51 = arith.constant 0 : index
    %98 = vector.load %arg5[%c0_50, %c0_51] : memref<8x32xbf16, #tpu.memory_space<vmem>>, vector<8x32xbf16>
    %c0_52 = arith.constant 0 : index
    %c0_53 = arith.constant 0 : index
    %99 = vector.load %arg3[%c0_52, %c0_53] : memref<32x128xbf16, #tpu.memory_space<vmem>>, vector<32x128xbf16>
    %cst_54 = arith.constant dense<0.000000e+00> : vector<8x128xf32>
    %100 = tpu.matmul %98, %99, %cst_54 {dimension_numbers = #tpu.dot_dimension_numbers<[1], [0], [0], [1], [0, 0, 1, 1], [], []>} : vector<8x32xbf16>, vector<32x128xbf16>, vector<8x128xf32> -> vector<8x128xf32>
    %101 = arith.addf %97, %100 : vector<8x128xf32>
    %102 = vector.extract_strided_slice %101 {offsets = [0, 0], sizes = [8, 32], strides = [1, 1]} : vector<8x128xf32> to vector<8x32xf32>
    %cst_55 = arith.constant 5.000000e-01 : f32
    %103 = vector.broadcast %cst_55 : f32 to vector<8x32xf32>
    %104 = arith.mulf %103, %102 : vector<8x32xf32>
    %105 = math.tanh %104 : vector<8x32xf32>
    %cst_56 = arith.constant 1.000000e+00 : f32
    %106 = vector.broadcast %cst_56 : f32 to vector<8x32xf32>
    %107 = arith.addf %105, %106 : vector<8x32xf32>
    %cst_57 = arith.constant 5.000000e-01 : f32
    %108 = vector.broadcast %cst_57 : f32 to vector<8x32xf32>
    %109 = arith.mulf %108, %107 : vector<8x32xf32>
    %110 = vector.extract_strided_slice %101 {offsets = [0, 32], sizes = [8, 32], strides = [1, 1]} : vector<8x128xf32> to vector<8x32xf32>
    %cst_58 = arith.constant 5.000000e-01 : f32
    %111 = vector.broadcast %cst_58 : f32 to vector<8x32xf32>
    %112 = arith.mulf %111, %110 : vector<8x32xf32>
    %113 = math.tanh %112 : vector<8x32xf32>
    %cst_59 = arith.constant 1.000000e+00 : f32
    %114 = vector.broadcast %cst_59 : f32 to vector<8x32xf32>
    %115 = arith.addf %113, %114 : vector<8x32xf32>
    %cst_60 = arith.constant 5.000000e-01 : f32
    %116 = vector.broadcast %cst_60 : f32 to vector<8x32xf32>
    %117 = arith.mulf %116, %115 : vector<8x32xf32>
    %118 = vector.extract_strided_slice %101 {offsets = [0, 64], sizes = [8, 32], strides = [1, 1]} : vector<8x128xf32> to vector<8x32xf32>
    %119 = math.tanh %118 : vector<8x32xf32>
    %120 = vector.extract_strided_slice %101 {offsets = [0, 96], sizes = [8, 32], strides = [1, 1]} : vector<8x128xf32> to vector<8x32xf32>
    %cst_61 = arith.constant 5.000000e-01 : f32
    %121 = vector.broadcast %cst_61 : f32 to vector<8x32xf32>
    %122 = arith.mulf %121, %120 : vector<8x32xf32>
    %123 = math.tanh %122 : vector<8x32xf32>
    %cst_62 = arith.constant 1.000000e+00 : f32
    %124 = vector.broadcast %cst_62 : f32 to vector<8x32xf32>
    %125 = arith.addf %123, %124 : vector<8x32xf32>
    %cst_63 = arith.constant 5.000000e-01 : f32
    %126 = vector.broadcast %cst_63 : f32 to vector<8x32xf32>
    %127 = arith.mulf %126, %125 : vector<8x32xf32>
    %c0_64 = arith.constant 0 : index
    %c0_65 = arith.constant 0 : index
    %128 = vector.load %arg6[%c0_64, %c0_65] : memref<8x32xf32, #tpu.memory_space<vmem>>, vector<8x32xf32>
    %129 = arith.mulf %117, %128 : vector<8x32xf32>
    %130 = arith.mulf %109, %119 : vector<8x32xf32>
    %131 = arith.addf %129, %130 : vector<8x32xf32>
    %132 = math.tanh %131 : vector<8x32xf32>
    %133 = arith.mulf %127, %132 : vector<8x32xf32>
    %134 = arith.truncf %133 : vector<8x32xf32> to vector<8x32xbf16>
    %c0_66 = arith.constant 0 : index
    %c0_67 = arith.constant 0 : index
    %135 = vector.load %arg6[%c0_66, %c0_67] : memref<8x32xf32, #tpu.memory_space<vmem>>, vector<8x32xf32>
    tpu.vector_store %arg6[%c0_66, %c0_67], %131 {strides = array<i32>} : memref<8x32xf32, #tpu.memory_space<vmem>>, vector<8x32xf32>,
    %c0_68 = arith.constant 0 : index
    %c0_69 = arith.constant 0 : index
    %136 = vector.load %arg5[%c0_68, %c0_69] : memref<8x32xbf16, #tpu.memory_space<vmem>>, vector<8x32xbf16>
    tpu.vector_store %arg5[%c0_68, %c0_69], %134 {strides = array<i32>} : memref<8x32xbf16, #tpu.memory_space<vmem>>, vector<8x32xbf16>,
    %137 = arith.index_cast %c2_i32 : i32 to index
    %c0_70 = arith.constant 0 : index
    %c0_71 = arith.constant 0 : index
    %138 = vector.load %arg4[%137, %c0_70, %c0_71] : memref<9x8x32xbf16, #tpu.memory_space<vmem>>, vector<1x8x32xbf16>
    %139 = vector.shape_cast %138 : vector<1x8x32xbf16> to vector<8x32xbf16>
    %140 = vector.shape_cast %134 : vector<8x32xbf16> to vector<1x8x32xbf16>
    tpu.vector_store %arg4[%137, %c0_70, %c0_71], %140 {strides = array<i32>} : memref<9x8x32xbf16, #tpu.memory_space<vmem>>, vector<1x8x32xbf16>,
    %c3_i32 = arith.constant 3 : i32
    %141 = arith.index_cast %c3_i32 : i32 to index
    %c0_72 = arith.constant 0 : index
    %c0_73 = arith.constant 0 : index
    %142 = vector.load %arg2[%141, %c0_72, %c0_73] : memref<9x8x128xf32, #tpu.memory_space<vmem>>, vector<1x8x128xf32>
    %143 = vector.shape_cast %142 : vector<1x8x128xf32> to vector<8x128xf32>
    %c0_74 = arith.constant 0 : index
    %c0_75 = arith.constant 0 : index
    %144 = vector.load %arg5[%c0_74, %c0_75] : memref<8x32xbf16, #tpu.memory_space<vmem>>, vector<8x32xbf16>
    %c0_76 = arith.constant 0 : index
    %c0_77 = arith.constant 0 : index
    %145 = vector.load %arg3[%c0_76, %c0_77] : memref<32x128xbf16, #tpu.memory_space<vmem>>, vector<32x128xbf16>
    %cst_78 = arith.constant dense<0.000000e+00> : vector<8x128xf32>
    %146 = tpu.matmul %144, %145, %cst_78 {dimension_numbers = #tpu.dot_dimension_numbers<[1], [0], [0], [1], [0, 0, 1, 1], [], []>} : vector<8x32xbf16>, vector<32x128xbf16>, vector<8x128xf32> -> vector<8x128xf32>
    %147 = arith.addf %143, %146 : vector<8x128xf32>
    %148 = vector.extract_strided_slice %147 {offsets = [0, 0], sizes = [8, 32], strides = [1, 1]} : vector<8x128xf32> to vector<8x32xf32>
    %cst_79 = arith.constant 5.000000e-01 : f32
    %149 = vector.broadcast %cst_79 : f32 to vector<8x32xf32>
    %150 = arith.mulf %149, %148 : vector<8x32xf32>
    %151 = math.tanh %150 : vector<8x32xf32>
    %cst_80 = arith.constant 1.000000e+00 : f32
    %152 = vector.broadcast %cst_80 : f32 to vector<8x32xf32>
    %153 = arith.addf %151, %152 : vector<8x32xf32>
    %cst_81 = arith.constant 5.000000e-01 : f32
    %154 = vector.broadcast %cst_81 : f32 to vector<8x32xf32>
    %155 = arith.mulf %154, %153 : vector<8x32xf32>
    %156 = vector.extract_strided_slice %147 {offsets = [0, 32], sizes = [8, 32], strides = [1, 1]} : vector<8x128xf32> to vector<8x32xf32>
    %cst_82 = arith.constant 5.000000e-01 : f32
    %157 = vector.broadcast %cst_82 : f32 to vector<8x32xf32>
    %158 = arith.mulf %157, %156 : vector<8x32xf32>
    %159 = math.tanh %158 : vector<8x32xf32>
    %cst_83 = arith.constant 1.000000e+00 : f32
    %160 = vector.broadcast %cst_83 : f32 to vector<8x32xf32>
    %161 = arith.addf %159, %160 : vector<8x32xf32>
    %cst_84 = arith.constant 5.000000e-01 : f32
    %162 = vector.broadcast %cst_84 : f32 to vector<8x32xf32>
    %163 = arith.mulf %162, %161 : vector<8x32xf32>
    %164 = vector.extract_strided_slice %147 {offsets = [0, 64], sizes = [8, 32], strides = [1, 1]} : vector<8x128xf32> to vector<8x32xf32>
    %165 = math.tanh %164 : vector<8x32xf32>
    %166 = vector.extract_strided_slice %147 {offsets = [0, 96], sizes = [8, 32], strides = [1, 1]} : vector<8x128xf32> to vector<8x32xf32>
    %cst_85 = arith.constant 5.000000e-01 : f32
    %167 = vector.broadcast %cst_85 : f32 to vector<8x32xf32>
    %168 = arith.mulf %167, %166 : vector<8x32xf32>
    %169 = math.tanh %168 : vector<8x32xf32>
    %cst_86 = arith.constant 1.000000e+00 : f32
    %170 = vector.broadcast %cst_86 : f32 to vector<8x32xf32>
    %171 = arith.addf %169, %170 : vector<8x32xf32>
    %cst_87 = arith.constant 5.000000e-01 : f32
    %172 = vector.broadcast %cst_87 : f32 to vector<8x32xf32>
    %173 = arith.mulf %172, %171 : vector<8x32xf32>
    %c0_88 = arith.constant 0 : index
    %c0_89 = arith.constant 0 : index
    %174 = vector.load %arg6[%c0_88, %c0_89] : memref<8x32xf32, #tpu.memory_space<vmem>>, vector<8x32xf32>
    %175 = arith.mulf %163, %174 : vector<8x32xf32>
    %176 = arith.mulf %155, %165 : vector<8x32xf32>
    %177 = arith.addf %175, %176 : vector<8x32xf32>
    %178 = math.tanh %177 : vector<8x32xf32>
    %179 = arith.mulf %173, %178 : vector<8x32xf32>
    %180 = arith.truncf %179 : vector<8x32xf32> to vector<8x32xbf16>
    %c0_90 = arith.constant 0 : index
    %c0_91 = arith.constant 0 : index
    %181 = vector.load %arg6[%c0_90, %c0_91] : memref<8x32xf32, #tpu.memory_space<vmem>>, vector<8x32xf32>
    tpu.vector_store %arg6[%c0_90, %c0_91], %177 {strides = array<i32>} : memref<8x32xf32, #tpu.memory_space<vmem>>, vector<8x32xf32>,
    %c0_92 = arith.constant 0 : index
    %c0_93 = arith.constant 0 : index
    %182 = vector.load %arg5[%c0_92, %c0_93] : memref<8x32xbf16, #tpu.memory_space<vmem>>, vector<8x32xbf16>
    tpu.vector_store %arg5[%c0_92, %c0_93], %180 {strides = array<i32>} : memref<8x32xbf16, #tpu.memory_space<vmem>>, vector<8x32xbf16>,
    %183 = arith.index_cast %c3_i32 : i32 to index
    %c0_94 = arith.constant 0 : index
    %c0_95 = arith.constant 0 : index
    %184 = vector.load %arg4[%183, %c0_94, %c0_95] : memref<9x8x32xbf16, #tpu.memory_space<vmem>>, vector<1x8x32xbf16>
    %185 = vector.shape_cast %184 : vector<1x8x32xbf16> to vector<8x32xbf16>
    %186 = vector.shape_cast %180 : vector<8x32xbf16> to vector<1x8x32xbf16>
    tpu.vector_store %arg4[%183, %c0_94, %c0_95], %186 {strides = array<i32>} : memref<9x8x32xbf16, #tpu.memory_space<vmem>>, vector<1x8x32xbf16>,
    %c4_i32 = arith.constant 4 : i32
    %187 = arith.index_cast %c4_i32 : i32 to index
    %c0_96 = arith.constant 0 : index
    %c0_97 = arith.constant 0 : index
    %188 = vector.load %arg2[%187, %c0_96, %c0_97] : memref<9x8x128xf32, #tpu.memory_space<vmem>>, vector<1x8x128xf32>
    %189 = vector.shape_cast %188 : vector<1x8x128xf32> to vector<8x128xf32>
    %c0_98 = arith.constant 0 : index
    %c0_99 = arith.constant 0 : index
    %190 = vector.load %arg5[%c0_98, %c0_99] : memref<8x32xbf16, #tpu.memory_space<vmem>>, vector<8x32xbf16>
    %c0_100 = arith.constant 0 : index
    %c0_101 = arith.constant 0 : index
    %191 = vector.load %arg3[%c0_100, %c0_101] : memref<32x128xbf16, #tpu.memory_space<vmem>>, vector<32x128xbf16>
    %cst_102 = arith.constant dense<0.000000e+00> : vector<8x128xf32>
    %192 = tpu.matmul %190, %191, %cst_102 {dimension_numbers = #tpu.dot_dimension_numbers<[1], [0], [0], [1], [0, 0, 1, 1], [], []>} : vector<8x32xbf16>, vector<32x128xbf16>, vector<8x128xf32> -> vector<8x128xf32>
    %193 = arith.addf %189, %192 : vector<8x128xf32>
    %194 = vector.extract_strided_slice %193 {offsets = [0, 0], sizes = [8, 32], strides = [1, 1]} : vector<8x128xf32> to vector<8x32xf32>
    %cst_103 = arith.constant 5.000000e-01 : f32
    %195 = vector.broadcast %cst_103 : f32 to vector<8x32xf32>
    %196 = arith.mulf %195, %194 : vector<8x32xf32>
    %197 = math.tanh %196 : vector<8x32xf32>
    %cst_104 = arith.constant 1.000000e+00 : f32
    %198 = vector.broadcast %cst_104 : f32 to vector<8x32xf32>
    %199 = arith.addf %197, %198 : vector<8x32xf32>
    %cst_105 = arith.constant 5.000000e-01 : f32
    %200 = vector.broadcast %cst_105 : f32 to vector<8x32xf32>
    %201 = arith.mulf %200, %199 : vector<8x32xf32>
    %202 = vector.extract_strided_slice %193 {offsets = [0, 32], sizes = [8, 32], strides = [1, 1]} : vector<8x128xf32> to vector<8x32xf32>
    %cst_106 = arith.constant 5.000000e-01 : f32
    %203 = vector.broadcast %cst_106 : f32 to vector<8x32xf32>
    %204 = arith.mulf %203, %202 : vector<8x32xf32>
    %205 = math.tanh %204 : vector<8x32xf32>
    %cst_107 = arith.constant 1.000000e+00 : f32
    %206 = vector.broadcast %cst_107 : f32 to vector<8x32xf32>
    %207 = arith.addf %205, %206 : vector<8x32xf32>
    %cst_108 = arith.constant 5.000000e-01 : f32
    %208 = vector.broadcast %cst_108 : f32 to vector<8x32xf32>
    %209 = arith.mulf %208, %207 : vector<8x32xf32>
    %210 = vector.extract_strided_slice %193 {offsets = [0, 64], sizes = [8, 32], strides = [1, 1]} : vector<8x128xf32> to vector<8x32xf32>
    %211 = math.tanh %210 : vector<8x32xf32>
    %212 = vector.extract_strided_slice %193 {offsets = [0, 96], sizes = [8, 32], strides = [1, 1]} : vector<8x128xf32> to vector<8x32xf32>
    %cst_109 = arith.constant 5.000000e-01 : f32
    %213 = vector.broadcast %cst_109 : f32 to vector<8x32xf32>
    %214 = arith.mulf %213, %212 : vector<8x32xf32>
    %215 = math.tanh %214 : vector<8x32xf32>
    %cst_110 = arith.constant 1.000000e+00 : f32
    %216 = vector.broadcast %cst_110 : f32 to vector<8x32xf32>
    %217 = arith.addf %215, %216 : vector<8x32xf32>
    %cst_111 = arith.constant 5.000000e-01 : f32
    %218 = vector.broadcast %cst_111 : f32 to vector<8x32xf32>
    %219 = arith.mulf %218, %217 : vector<8x32xf32>
    %c0_112 = arith.constant 0 : index
    %c0_113 = arith.constant 0 : index
    %220 = vector.load %arg6[%c0_112, %c0_113] : memref<8x32xf32, #tpu.memory_space<vmem>>, vector<8x32xf32>
    %221 = arith.mulf %209, %220 : vector<8x32xf32>
    %222 = arith.mulf %201, %211 : vector<8x32xf32>
    %223 = arith.addf %221, %222 : vector<8x32xf32>
    %224 = math.tanh %223 : vector<8x32xf32>
    %225 = arith.mulf %219, %224 : vector<8x32xf32>
    %226 = arith.truncf %225 : vector<8x32xf32> to vector<8x32xbf16>
    %c0_114 = arith.constant 0 : index
    %c0_115 = arith.constant 0 : index
    %227 = vector.load %arg6[%c0_114, %c0_115] : memref<8x32xf32, #tpu.memory_space<vmem>>, vector<8x32xf32>
    tpu.vector_store %arg6[%c0_114, %c0_115], %223 {strides = array<i32>} : memref<8x32xf32, #tpu.memory_space<vmem>>, vector<8x32xf32>,
    %c0_116 = arith.constant 0 : index
    %c0_117 = arith.constant 0 : index
    %228 = vector.load %arg5[%c0_116, %c0_117] : memref<8x32xbf16, #tpu.memory_space<vmem>>, vector<8x32xbf16>
    tpu.vector_store %arg5[%c0_116, %c0_117], %226 {strides = array<i32>} : memref<8x32xbf16, #tpu.memory_space<vmem>>, vector<8x32xbf16>,
    %229 = arith.index_cast %c4_i32 : i32 to index
    %c0_118 = arith.constant 0 : index
    %c0_119 = arith.constant 0 : index
    %230 = vector.load %arg4[%229, %c0_118, %c0_119] : memref<9x8x32xbf16, #tpu.memory_space<vmem>>, vector<1x8x32xbf16>
    %231 = vector.shape_cast %230 : vector<1x8x32xbf16> to vector<8x32xbf16>
    %232 = vector.shape_cast %226 : vector<8x32xbf16> to vector<1x8x32xbf16>
    tpu.vector_store %arg4[%229, %c0_118, %c0_119], %232 {strides = array<i32>} : memref<9x8x32xbf16, #tpu.memory_space<vmem>>, vector<1x8x32xbf16>,
    %c5_i32 = arith.constant 5 : i32
    %233 = arith.index_cast %c5_i32 : i32 to index
    %c0_120 = arith.constant 0 : index
    %c0_121 = arith.constant 0 : index
    %234 = vector.load %arg2[%233, %c0_120, %c0_121] : memref<9x8x128xf32, #tpu.memory_space<vmem>>, vector<1x8x128xf32>
    %235 = vector.shape_cast %234 : vector<1x8x128xf32> to vector<8x128xf32>
    %c0_122 = arith.constant 0 : index
    %c0_123 = arith.constant 0 : index
    %236 = vector.load %arg5[%c0_122, %c0_123] : memref<8x32xbf16, #tpu.memory_space<vmem>>, vector<8x32xbf16>
    %c0_124 = arith.constant 0 : index
    %c0_125 = arith.constant 0 : index
    %237 = vector.load %arg3[%c0_124, %c0_125] : memref<32x128xbf16, #tpu.memory_space<vmem>>, vector<32x128xbf16>
    %cst_126 = arith.constant dense<0.000000e+00> : vector<8x128xf32>
    %238 = tpu.matmul %236, %237, %cst_126 {dimension_numbers = #tpu.dot_dimension_numbers<[1], [0], [0], [1], [0, 0, 1, 1], [], []>} : vector<8x32xbf16>, vector<32x128xbf16>, vector<8x128xf32> -> vector<8x128xf32>
    %239 = arith.addf %235, %238 : vector<8x128xf32>
    %240 = vector.extract_strided_slice %239 {offsets = [0, 0], sizes = [8, 32], strides = [1, 1]} : vector<8x128xf32> to vector<8x32xf32>
    %cst_127 = arith.constant 5.000000e-01 : f32
    %241 = vector.broadcast %cst_127 : f32 to vector<8x32xf32>
    %242 = arith.mulf %241, %240 : vector<8x32xf32>
    %243 = math.tanh %242 : vector<8x32xf32>
    %cst_128 = arith.constant 1.000000e+00 : f32
    %244 = vector.broadcast %cst_128 : f32 to vector<8x32xf32>
    %245 = arith.addf %243, %244 : vector<8x32xf32>
    %cst_129 = arith.constant 5.000000e-01 : f32
    %246 = vector.broadcast %cst_129 : f32 to vector<8x32xf32>
    %247 = arith.mulf %246, %245 : vector<8x32xf32>
    %248 = vector.extract_strided_slice %239 {offsets = [0, 32], sizes = [8, 32], strides = [1, 1]} : vector<8x128xf32> to vector<8x32xf32>
    %cst_130 = arith.constant 5.000000e-01 : f32
    %249 = vector.broadcast %cst_130 : f32 to vector<8x32xf32>
    %250 = arith.mulf %249, %248 : vector<8x32xf32>
    %251 = math.tanh %250 : vector<8x32xf32>
    %cst_131 = arith.constant 1.000000e+00 : f32
    %252 = vector.broadcast %cst_131 : f32 to vector<8x32xf32>
    %253 = arith.addf %251, %252 : vector<8x32xf32>
    %cst_132 = arith.constant 5.000000e-01 : f32
    %254 = vector.broadcast %cst_132 : f32 to vector<8x32xf32>
    %255 = arith.mulf %254, %253 : vector<8x32xf32>
    %256 = vector.extract_strided_slice %239 {offsets = [0, 64], sizes = [8, 32], strides = [1, 1]} : vector<8x128xf32> to vector<8x32xf32>
    %257 = math.tanh %256 : vector<8x32xf32>
    %258 = vector.extract_strided_slice %239 {offsets = [0, 96], sizes = [8, 32], strides = [1, 1]} : vector<8x128xf32> to vector<8x32xf32>
    %cst_133 = arith.constant 5.000000e-01 : f32
    %259 = vector.broadcast %cst_133 : f32 to vector<8x32xf32>
    %260 = arith.mulf %259, %258 : vector<8x32xf32>
    %261 = math.tanh %260 : vector<8x32xf32>
    %cst_134 = arith.constant 1.000000e+00 : f32
    %262 = vector.broadcast %cst_134 : f32 to vector<8x32xf32>
    %263 = arith.addf %261, %262 : vector<8x32xf32>
    %cst_135 = arith.constant 5.000000e-01 : f32
    %264 = vector.broadcast %cst_135 : f32 to vector<8x32xf32>
    %265 = arith.mulf %264, %263 : vector<8x32xf32>
    %c0_136 = arith.constant 0 : index
    %c0_137 = arith.constant 0 : index
    %266 = vector.load %arg6[%c0_136, %c0_137] : memref<8x32xf32, #tpu.memory_space<vmem>>, vector<8x32xf32>
    %267 = arith.mulf %255, %266 : vector<8x32xf32>
    %268 = arith.mulf %247, %257 : vector<8x32xf32>
    %269 = arith.addf %267, %268 : vector<8x32xf32>
    %270 = math.tanh %269 : vector<8x32xf32>
    %271 = arith.mulf %265, %270 : vector<8x32xf32>
    %272 = arith.truncf %271 : vector<8x32xf32> to vector<8x32xbf16>
    %c0_138 = arith.constant 0 : index
    %c0_139 = arith.constant 0 : index
    %273 = vector.load %arg6[%c0_138, %c0_139] : memref<8x32xf32, #tpu.memory_space<vmem>>, vector<8x32xf32>
    tpu.vector_store %arg6[%c0_138, %c0_139], %269 {strides = array<i32>} : memref<8x32xf32, #tpu.memory_space<vmem>>, vector<8x32xf32>,
    %c0_140 = arith.constant 0 : index
    %c0_141 = arith.constant 0 : index
    %274 = vector.load %arg5[%c0_140, %c0_141] : memref<8x32xbf16, #tpu.memory_space<vmem>>, vector<8x32xbf16>
    tpu.vector_store %arg5[%c0_140, %c0_141], %272 {strides = array<i32>} : memref<8x32xbf16, #tpu.memory_space<vmem>>, vector<8x32xbf16>,
    %275 = arith.index_cast %c5_i32 : i32 to index
    %c0_142 = arith.constant 0 : index
    %c0_143 = arith.constant 0 : index
    %276 = vector.load %arg4[%275, %c0_142, %c0_143] : memref<9x8x32xbf16, #tpu.memory_space<vmem>>, vector<1x8x32xbf16>
    %277 = vector.shape_cast %276 : vector<1x8x32xbf16> to vector<8x32xbf16>
    %278 = vector.shape_cast %272 : vector<8x32xbf16> to vector<1x8x32xbf16>
    tpu.vector_store %arg4[%275, %c0_142, %c0_143], %278 {strides = array<i32>} : memref<9x8x32xbf16, #tpu.memory_space<vmem>>, vector<1x8x32xbf16>,
    %c6_i32 = arith.constant 6 : i32
    %279 = arith.index_cast %c6_i32 : i32 to index
    %c0_144 = arith.constant 0 : index
    %c0_145 = arith.constant 0 : index
    %280 = vector.load %arg2[%279, %c0_144, %c0_145] : memref<9x8x128xf32, #tpu.memory_space<vmem>>, vector<1x8x128xf32>
    %281 = vector.shape_cast %280 : vector<1x8x128xf32> to vector<8x128xf32>
    %c0_146 = arith.constant 0 : index
    %c0_147 = arith.constant 0 : index
    %282 = vector.load %arg5[%c0_146, %c0_147] : memref<8x32xbf16, #tpu.memory_space<vmem>>, vector<8x32xbf16>
    %c0_148 = arith.constant 0 : index
    %c0_149 = arith.constant 0 : index
    %283 = vector.load %arg3[%c0_148, %c0_149] : memref<32x128xbf16, #tpu.memory_space<vmem>>, vector<32x128xbf16>
    %cst_150 = arith.constant dense<0.000000e+00> : vector<8x128xf32>
    %284 = tpu.matmul %282, %283, %cst_150 {dimension_numbers = #tpu.dot_dimension_numbers<[1], [0], [0], [1], [0, 0, 1, 1], [], []>} : vector<8x32xbf16>, vector<32x128xbf16>, vector<8x128xf32> -> vector<8x128xf32>
    %285 = arith.addf %281, %284 : vector<8x128xf32>
    %286 = vector.extract_strided_slice %285 {offsets = [0, 0], sizes = [8, 32], strides = [1, 1]} : vector<8x128xf32> to vector<8x32xf32>
    %cst_151 = arith.constant 5.000000e-01 : f32
    %287 = vector.broadcast %cst_151 : f32 to vector<8x32xf32>
    %288 = arith.mulf %287, %286 : vector<8x32xf32>
    %289 = math.tanh %288 : vector<8x32xf32>
    %cst_152 = arith.constant 1.000000e+00 : f32
    %290 = vector.broadcast %cst_152 : f32 to vector<8x32xf32>
    %291 = arith.addf %289, %290 : vector<8x32xf32>
    %cst_153 = arith.constant 5.000000e-01 : f32
    %292 = vector.broadcast %cst_153 : f32 to vector<8x32xf32>
    %293 = arith.mulf %292, %291 : vector<8x32xf32>
    %294 = vector.extract_strided_slice %285 {offsets = [0, 32], sizes = [8, 32], strides = [1, 1]} : vector<8x128xf32> to vector<8x32xf32>
    %cst_154 = arith.constant 5.000000e-01 : f32
    %295 = vector.broadcast %cst_154 : f32 to vector<8x32xf32>
    %296 = arith.mulf %295, %294 : vector<8x32xf32>
    %297 = math.tanh %296 : vector<8x32xf32>
    %cst_155 = arith.constant 1.000000e+00 : f32
    %298 = vector.broadcast %cst_155 : f32 to vector<8x32xf32>
    %299 = arith.addf %297, %298 : vector<8x32xf32>
    %cst_156 = arith.constant 5.000000e-01 : f32
    %300 = vector.broadcast %cst_156 : f32 to vector<8x32xf32>
    %301 = arith.mulf %300, %299 : vector<8x32xf32>
    %302 = vector.extract_strided_slice %285 {offsets = [0, 64], sizes = [8, 32], strides = [1, 1]} : vector<8x128xf32> to vector<8x32xf32>
    %303 = math.tanh %302 : vector<8x32xf32>
    %304 = vector.extract_strided_slice %285 {offsets = [0, 96], sizes = [8, 32], strides = [1, 1]} : vector<8x128xf32> to vector<8x32xf32>
    %cst_157 = arith.constant 5.000000e-01 : f32
    %305 = vector.broadcast %cst_157 : f32 to vector<8x32xf32>
    %306 = arith.mulf %305, %304 : vector<8x32xf32>
    %307 = math.tanh %306 : vector<8x32xf32>
    %cst_158 = arith.constant 1.000000e+00 : f32
    %308 = vector.broadcast %cst_158 : f32 to vector<8x32xf32>
    %309 = arith.addf %307, %308 : vector<8x32xf32>
    %cst_159 = arith.constant 5.000000e-01 : f32
    %310 = vector.broadcast %cst_159 : f32 to vector<8x32xf32>
    %311 = arith.mulf %310, %309 : vector<8x32xf32>
    %c0_160 = arith.constant 0 : index
    %c0_161 = arith.constant 0 : index
    %312 = vector.load %arg6[%c0_160, %c0_161] : memref<8x32xf32, #tpu.memory_space<vmem>>, vector<8x32xf32>
    %313 = arith.mulf %301, %312 : vector<8x32xf32>
    %314 = arith.mulf %293, %303 : vector<8x32xf32>
    %315 = arith.addf %313, %314 : vector<8x32xf32>
    %316 = math.tanh %315 : vector<8x32xf32>
    %317 = arith.mulf %311, %316 : vector<8x32xf32>
    %318 = arith.truncf %317 : vector<8x32xf32> to vector<8x32xbf16>
    %c0_162 = arith.constant 0 : index
    %c0_163 = arith.constant 0 : index
    %319 = vector.load %arg6[%c0_162, %c0_163] : memref<8x32xf32, #tpu.memory_space<vmem>>, vector<8x32xf32>
    tpu.vector_store %arg6[%c0_162, %c0_163], %315 {strides = array<i32>} : memref<8x32xf32, #tpu.memory_space<vmem>>, vector<8x32xf32>,
    %c0_164 = arith.constant 0 : index
    %c0_165 = arith.constant 0 : index
    %320 = vector.load %arg5[%c0_164, %c0_165] : memref<8x32xbf16, #tpu.memory_space<vmem>>, vector<8x32xbf16>
    tpu.vector_store %arg5[%c0_164, %c0_165], %318 {strides = array<i32>} : memref<8x32xbf16, #tpu.memory_space<vmem>>, vector<8x32xbf16>,
    %321 = arith.index_cast %c6_i32 : i32 to index
    %c0_166 = arith.constant 0 : index
    %c0_167 = arith.constant 0 : index
    %322 = vector.load %arg4[%321, %c0_166, %c0_167] : memref<9x8x32xbf16, #tpu.memory_space<vmem>>, vector<1x8x32xbf16>
    %323 = vector.shape_cast %322 : vector<1x8x32xbf16> to vector<8x32xbf16>
    %324 = vector.shape_cast %318 : vector<8x32xbf16> to vector<1x8x32xbf16>
    tpu.vector_store %arg4[%321, %c0_166, %c0_167], %324 {strides = array<i32>} : memref<9x8x32xbf16, #tpu.memory_space<vmem>>, vector<1x8x32xbf16>,
    %c7_i32 = arith.constant 7 : i32
    %325 = arith.index_cast %c7_i32 : i32 to index
    %c0_168 = arith.constant 0 : index
    %c0_169 = arith.constant 0 : index
    %326 = vector.load %arg2[%325, %c0_168, %c0_169] : memref<9x8x128xf32, #tpu.memory_space<vmem>>, vector<1x8x128xf32>
    %327 = vector.shape_cast %326 : vector<1x8x128xf32> to vector<8x128xf32>
    %c0_170 = arith.constant 0 : index
    %c0_171 = arith.constant 0 : index
    %328 = vector.load %arg5[%c0_170, %c0_171] : memref<8x32xbf16, #tpu.memory_space<vmem>>, vector<8x32xbf16>
    %c0_172 = arith.constant 0 : index
    %c0_173 = arith.constant 0 : index
    %329 = vector.load %arg3[%c0_172, %c0_173] : memref<32x128xbf16, #tpu.memory_space<vmem>>, vector<32x128xbf16>
    %cst_174 = arith.constant dense<0.000000e+00> : vector<8x128xf32>
    %330 = tpu.matmul %328, %329, %cst_174 {dimension_numbers = #tpu.dot_dimension_numbers<[1], [0], [0], [1], [0, 0, 1, 1], [], []>} : vector<8x32xbf16>, vector<32x128xbf16>, vector<8x128xf32> -> vector<8x128xf32>
    %331 = arith.addf %327, %330 : vector<8x128xf32>
    %332 = vector.extract_strided_slice %331 {offsets = [0, 0], sizes = [8, 32], strides = [1, 1]} : vector<8x128xf32> to vector<8x32xf32>
    %cst_175 = arith.constant 5.000000e-01 : f32
    %333 = vector.broadcast %cst_175 : f32 to vector<8x32xf32>
    %334 = arith.mulf %333, %332 : vector<8x32xf32>
    %335 = math.tanh %334 : vector<8x32xf32>
    %cst_176 = arith.constant 1.000000e+00 : f32
    %336 = vector.broadcast %cst_176 : f32 to vector<8x32xf32>
    %337 = arith.addf %335, %336 : vector<8x32xf32>
    %cst_177 = arith.constant 5.000000e-01 : f32
    %338 = vector.broadcast %cst_177 : f32 to vector<8x32xf32>
    %339 = arith.mulf %338, %337 : vector<8x32xf32>
    %340 = vector.extract_strided_slice %331 {offsets = [0, 32], sizes = [8, 32], strides = [1, 1]} : vector<8x128xf32> to vector<8x32xf32>
    %cst_178 = arith.constant 5.000000e-01 : f32
    %341 = vector.broadcast %cst_178 : f32 to vector<8x32xf32>
    %342 = arith.mulf %341, %340 : vector<8x32xf32>
    %343 = math.tanh %342 : vector<8x32xf32>
    %cst_179 = arith.constant 1.000000e+00 : f32
    %344 = vector.broadcast %cst_179 : f32 to vector<8x32xf32>
    %345 = arith.addf %343, %344 : vector<8x32xf32>
    %cst_180 = arith.constant 5.000000e-01 : f32
    %346 = vector.broadcast %cst_180 : f32 to vector<8x32xf32>
    %347 = arith.mulf %346, %345 : vector<8x32xf32>
    %348 = vector.extract_strided_slice %331 {offsets = [0, 64], sizes = [8, 32], strides = [1, 1]} : vector<8x128xf32> to vector<8x32xf32>
    %349 = math.tanh %348 : vector<8x32xf32>
    %350 = vector.extract_strided_slice %331 {offsets = [0, 96], sizes = [8, 32], strides = [1, 1]} : vector<8x128xf32> to vector<8x32xf32>
    %cst_181 = arith.constant 5.000000e-01 : f32
    %351 = vector.broadcast %cst_181 : f32 to vector<8x32xf32>
    %352 = arith.mulf %351, %350 : vector<8x32xf32>
    %353 = math.tanh %352 : vector<8x32xf32>
    %cst_182 = arith.constant 1.000000e+00 : f32
    %354 = vector.broadcast %cst_182 : f32 to vector<8x32xf32>
    %355 = arith.addf %353, %354 : vector<8x32xf32>
    %cst_183 = arith.constant 5.000000e-01 : f32
    %356 = vector.broadcast %cst_183 : f32 to vector<8x32xf32>
    %357 = arith.mulf %356, %355 : vector<8x32xf32>
    %c0_184 = arith.constant 0 : index
    %c0_185 = arith.constant 0 : index
    %358 = vector.load %arg6[%c0_184, %c0_185] : memref<8x32xf32, #tpu.memory_space<vmem>>, vector<8x32xf32>
    %359 = arith.mulf %347, %358 : vector<8x32xf32>
    %360 = arith.mulf %339, %349 : vector<8x32xf32>
    %361 = arith.addf %359, %360 : vector<8x32xf32>
    %362 = math.tanh %361 : vector<8x32xf32>
    %363 = arith.mulf %357, %362 : vector<8x32xf32>
    %364 = arith.truncf %363 : vector<8x32xf32> to vector<8x32xbf16>
    %c0_186 = arith.constant 0 : index
    %c0_187 = arith.constant 0 : index
    %365 = vector.load %arg6[%c0_186, %c0_187] : memref<8x32xf32, #tpu.memory_space<vmem>>, vector<8x32xf32>
    tpu.vector_store %arg6[%c0_186, %c0_187], %361 {strides = array<i32>} : memref<8x32xf32, #tpu.memory_space<vmem>>, vector<8x32xf32>,
    %c0_188 = arith.constant 0 : index
    %c0_189 = arith.constant 0 : index
    %366 = vector.load %arg5[%c0_188, %c0_189] : memref<8x32xbf16, #tpu.memory_space<vmem>>, vector<8x32xbf16>
    tpu.vector_store %arg5[%c0_188, %c0_189], %364 {strides = array<i32>} : memref<8x32xbf16, #tpu.memory_space<vmem>>, vector<8x32xbf16>,
    %367 = arith.index_cast %c7_i32 : i32 to index
    %c0_190 = arith.constant 0 : index
    %c0_191 = arith.constant 0 : index
    %368 = vector.load %arg4[%367, %c0_190, %c0_191] : memref<9x8x32xbf16, #tpu.memory_space<vmem>>, vector<1x8x32xbf16>
    %369 = vector.shape_cast %368 : vector<1x8x32xbf16> to vector<8x32xbf16>
    %370 = vector.shape_cast %364 : vector<8x32xbf16> to vector<1x8x32xbf16>
    tpu.vector_store %arg4[%367, %c0_190, %c0_191], %370 {strides = array<i32>} : memref<9x8x32xbf16, #tpu.memory_space<vmem>>, vector<1x8x32xbf16>,
    %c8_i32 = arith.constant 8 : i32
    %371 = arith.index_cast %c8_i32 : i32 to index
    %c0_192 = arith.constant 0 : index
    %c0_193 = arith.constant 0 : index
    %372 = vector.load %arg2[%371, %c0_192, %c0_193] : memref<9x8x128xf32, #tpu.memory_space<vmem>>, vector<1x8x128xf32>
    %373 = vector.shape_cast %372 : vector<1x8x128xf32> to vector<8x128xf32>
    %c0_194 = arith.constant 0 : index
    %c0_195 = arith.constant 0 : index
    %374 = vector.load %arg5[%c0_194, %c0_195] : memref<8x32xbf16, #tpu.memory_space<vmem>>, vector<8x32xbf16>
    %c0_196 = arith.constant 0 : index
    %c0_197 = arith.constant 0 : index
    %375 = vector.load %arg3[%c0_196, %c0_197] : memref<32x128xbf16, #tpu.memory_space<vmem>>, vector<32x128xbf16>
    %cst_198 = arith.constant dense<0.000000e+00> : vector<8x128xf32>
    %376 = tpu.matmul %374, %375, %cst_198 {dimension_numbers = #tpu.dot_dimension_numbers<[1], [0], [0], [1], [0, 0, 1, 1], [], []>} : vector<8x32xbf16>, vector<32x128xbf16>, vector<8x128xf32> -> vector<8x128xf32>
    %377 = arith.addf %373, %376 : vector<8x128xf32>
    %378 = vector.extract_strided_slice %377 {offsets = [0, 0], sizes = [8, 32], strides = [1, 1]} : vector<8x128xf32> to vector<8x32xf32>
    %cst_199 = arith.constant 5.000000e-01 : f32
    %379 = vector.broadcast %cst_199 : f32 to vector<8x32xf32>
    %380 = arith.mulf %379, %378 : vector<8x32xf32>
    %381 = math.tanh %380 : vector<8x32xf32>
    %cst_200 = arith.constant 1.000000e+00 : f32
    %382 = vector.broadcast %cst_200 : f32 to vector<8x32xf32>
    %383 = arith.addf %381, %382 : vector<8x32xf32>
    %cst_201 = arith.constant 5.000000e-01 : f32
    %384 = vector.broadcast %cst_201 : f32 to vector<8x32xf32>
    %385 = arith.mulf %384, %383 : vector<8x32xf32>
    %386 = vector.extract_strided_slice %377 {offsets = [0, 32], sizes = [8, 32], strides = [1, 1]} : vector<8x128xf32> to vector<8x32xf32>
    %cst_202 = arith.constant 5.000000e-01 : f32
    %387 = vector.broadcast %cst_202 : f32 to vector<8x32xf32>
    %388 = arith.mulf %387, %386 : vector<8x32xf32>
    %389 = math.tanh %388 : vector<8x32xf32>
    %cst_203 = arith.constant 1.000000e+00 : f32
    %390 = vector.broadcast %cst_203 : f32 to vector<8x32xf32>
    %391 = arith.addf %389, %390 : vector<8x32xf32>
    %cst_204 = arith.constant 5.000000e-01 : f32
    %392 = vector.broadcast %cst_204 : f32 to vector<8x32xf32>
    %393 = arith.mulf %392, %391 : vector<8x32xf32>
    %394 = vector.extract_strided_slice %377 {offsets = [0, 64], sizes = [8, 32], strides = [1, 1]} : vector<8x128xf32> to vector<8x32xf32>
    %395 = math.tanh %394 : vector<8x32xf32>
    %396 = vector.extract_strided_slice %377 {offsets = [0, 96], sizes = [8, 32], strides = [1, 1]} : vector<8x128xf32> to vector<8x32xf32>
    %cst_205 = arith.constant 5.000000e-01 : f32
    %397 = vector.broadcast %cst_205 : f32 to vector<8x32xf32>
    %398 = arith.mulf %397, %396 : vector<8x32xf32>
    %399 = math.tanh %398 : vector<8x32xf32>
    %cst_206 = arith.constant 1.000000e+00 : f32
    %400 = vector.broadcast %cst_206 : f32 to vector<8x32xf32>
    %401 = arith.addf %399, %400 : vector<8x32xf32>
    %cst_207 = arith.constant 5.000000e-01 : f32
    %402 = vector.broadcast %cst_207 : f32 to vector<8x32xf32>
    %403 = arith.mulf %402, %401 : vector<8x32xf32>
    %c0_208 = arith.constant 0 : index
    %c0_209 = arith.constant 0 : index
    %404 = vector.load %arg6[%c0_208, %c0_209] : memref<8x32xf32, #tpu.memory_space<vmem>>, vector<8x32xf32>
    %405 = arith.mulf %393, %404 : vector<8x32xf32>
    %406 = arith.mulf %385, %395 : vector<8x32xf32>
    %407 = arith.addf %405, %406 : vector<8x32xf32>
    %408 = math.tanh %407 : vector<8x32xf32>
    %409 = arith.mulf %403, %408 : vector<8x32xf32>
    %410 = arith.truncf %409 : vector<8x32xf32> to vector<8x32xbf16>
    %c0_210 = arith.constant 0 : index
    %c0_211 = arith.constant 0 : index
    %411 = vector.load %arg6[%c0_210, %c0_211] : memref<8x32xf32, #tpu.memory_space<vmem>>, vector<8x32xf32>
    tpu.vector_store %arg6[%c0_210, %c0_211], %407 {strides = array<i32>} : memref<8x32xf32, #tpu.memory_space<vmem>>, vector<8x32xf32>,
    %c0_212 = arith.constant 0 : index
    %c0_213 = arith.constant 0 : index
    %412 = vector.load %arg5[%c0_212, %c0_213] : memref<8x32xbf16, #tpu.memory_space<vmem>>, vector<8x32xbf16>
    tpu.vector_store %arg5[%c0_212, %c0_213], %410 {strides = array<i32>} : memref<8x32xbf16, #tpu.memory_space<vmem>>, vector<8x32xbf16>,
    %413 = arith.index_cast %c8_i32 : i32 to index
    %c0_214 = arith.constant 0 : index
    %c0_215 = arith.constant 0 : index
    %414 = vector.load %arg4[%413, %c0_214, %c0_215] : memref<9x8x32xbf16, #tpu.memory_space<vmem>>, vector<1x8x32xbf16>
    %415 = vector.shape_cast %414 : vector<1x8x32xbf16> to vector<8x32xbf16>
    %416 = vector.shape_cast %410 : vector<8x32xbf16> to vector<1x8x32xbf16>
    tpu.vector_store %arg4[%413, %c0_214, %c0_215], %416 {strides = array<i32>} : memref<9x8x32xbf16, #tpu.memory_space<vmem>>, vector<1x8x32xbf16>,
    %c9_i32 = arith.constant 9 : i32
    return
  }
  func.func @transform_0(%arg0: i32, %arg1: i32) -> (i32, i32, i32) {
    %c0_i32 = arith.constant 0 : i32
    %c0_i32_0 = arith.constant 0 : i32
    return %arg1, %arg0, %c0_i32 : i32, i32, i32
  }
  func.func @transform_1(%arg0: i32, %arg1: i32) -> (i32, i32) {
    %c0_i32 = arith.constant 0 : i32
    %c0_i32_0 = arith.constant 0 : i32
    %c0_i32_1 = arith.constant 0 : i32
    return %c0_i32, %c0_i32_0 : i32, i32
  }
  func.func @transform_2(%arg0: i32, %arg1: i32) -> (i32, i32, i32) {
    %c0_i32 = arith.constant 0 : i32
    %c0_i32_0 = arith.constant 0 : i32
    return %arg1, %arg0, %c0_i32 : i32, i32, i32
  }
}

module attributes {stable_mosaic.version = 11 : i64} {
  func.func @_linear_kernel(%arg0: i32, %arg1: i32, %arg2: memref<72x32xbf16, #tpu.memory_space<vmem>>, %arg3: memref<32x128xbf16, #tpu.memory_space<vmem>>, %arg4: memref<1x128xf32, #tpu.memory_space<vmem>>, %arg5: memref<72x128xf32, #tpu.memory_space<vmem>>) attributes {dimension_semantics = [#tpu.dimension_semantics<parallel>, #tpu.dimension_semantics<parallel>], iteration_bounds = array<i64: 1, 1>, scalar_prefetch = 0 : i64, scratch_operands = 0 : i64, tpu.core_type = #tpu.core_type<tc>, window_params = [{transform_indices = @transform_0, window_bounds = array<i64: 72, 32>}, {transform_indices = @transform_1, window_bounds = array<i64: 32, 128>}, {transform_indices = @transform_2, window_bounds = array<i64: 1, 128>}, {transform_indices = @transform_3, window_bounds = array<i64: 72, 128>}]} {
    %c0 = arith.constant 0 : index
    %c0_0 = arith.constant 0 : index
    %0 = vector.load %arg2[%c0, %c0_0] : memref<72x32xbf16, #tpu.memory_space<vmem>>, vector<72x32xbf16>
    %c0_1 = arith.constant 0 : index
    %c0_2 = arith.constant 0 : index
    %1 = vector.load %arg3[%c0_1, %c0_2] : memref<32x128xbf16, #tpu.memory_space<vmem>>, vector<32x128xbf16>
    %cst = arith.constant dense<0.000000e+00> : vector<72x128xf32>
    %2 = tpu.matmul %0, %1, %cst {dimension_numbers = #tpu.dot_dimension_numbers<[1], [0], [0], [1], [0, 0, 1, 1], [], []>} : vector<72x32xbf16>, vector<32x128xbf16>, vector<72x128xf32> -> vector<72x128xf32>
    %c0_3 = arith.constant 0 : index
    %c0_4 = arith.constant 0 : index
    %3 = vector.load %arg4[%c0_3, %c0_4] : memref<1x128xf32, #tpu.memory_space<vmem>>, vector<1x128xf32>
    %4 = vector.broadcast %3 : vector<1x128xf32> to vector<72x128xf32>
    %5 = arith.addf %2, %4 : vector<72x128xf32>
    %c0_5 = arith.constant 0 : index
    %c0_6 = arith.constant 0 : index
    %6 = vector.load %arg5[%c0_5, %c0_6] : memref<72x128xf32, #tpu.memory_space<vmem>>, vector<72x128xf32>
    tpu.vector_store %arg5[%c0_5, %c0_6], %5 {strides = array<i32>} : memref<72x128xf32, #tpu.memory_space<vmem>>, vector<72x128xf32>,
    return
  }
  func.func @transform_0(%arg0: i32, %arg1: i32) -> (i32, i32) {
    %c0_i32 = arith.constant 0 : i32
    %c0_i32_0 = arith.constant 0 : i32
    return %arg0, %c0_i32 : i32, i32
  }
  func.func @transform_1(%arg0: i32, %arg1: i32) -> (i32, i32) {
    %c0_i32 = arith.constant 0 : i32
    %c0_i32_0 = arith.constant 0 : i32
    return %c0_i32, %arg1 : i32, i32
  }
  func.func @transform_2(%arg0: i32, %arg1: i32) -> (i32, i32) {
    %c0_i32 = arith.constant 0 : i32
    %c0_i32_0 = arith.constant 0 : i32
    return %c0_i32, %arg1 : i32, i32
  }
  func.func @transform_3(%arg0: i32, %arg1: i32) -> (i32, i32) {
    %c0_i32 = arith.constant 0 : i32
    return %arg0, %arg1 : i32, i32
  }
}

</mosaic_0001>

<llo_original>
// kernel: rnn_forward.5
$region0: #{rnn_forward.5}
  #allocation0 [shape = 'u32[]', space=smem, size = 0x4, offset = 0x4, fixed_abs, tag = 'smem constant byte address 0x4 - core index']
  #allocation1 [shape = 'u32[72,128]{1,0:T(1,128)}', space=vmem, size = 0x9000, scoped, tag = 'internal scratch']
  %s0 = inlined_call_operand.vmem [shape: bf16[72,16], index: 0, kind: input, shape index: {}]
  %s1 = inlined_call_operand.vmem [shape: bf16[16,128], index: 1, kind: input, shape index: {}]
  %s2 = inlined_call_operand.vmem [shape: f32[1,128], index: 2, kind: input, shape index: {}]
  %s3 = inlined_call_operand.vmem [shape: f32[72,128], index: 3, kind: output, shape index: {}]
  %s4 = sld [smem:[#allocation0]]
  $region22: #{rnn_forward.5} parent=0
    _
  %s6 = ssub.s32 1, %s4
  %s7 = scalar_select 0, %s6, %s4
  // Predicated region
  $region2: #{rnn_forward.5} parent=0 // pred_check
    _
  $region3: #{rnn_forward.5} parent=0 // pred_check_branch
    %9 = sbr.rel (0) target = $region5
  $region4: #{rnn_forward.5} parent=0 // pred_region
    _
  $region5: #{rnn_forward.5} parent=0 // pred_fallthru
    _
  // Predicated region
  $region6: #{rnn_forward.5} parent=0 // pred_check
    _
  $region7: #{rnn_forward.5} parent=0 // pred_check_branch
    %11 = sbr.rel (0) target = $region9
  $region8: #{rnn_forward.5} parent=0 // pred_region
    _
  $region9: #{rnn_forward.5} parent=0 // pred_fallthru
    _
  // Predicated region
  $region10: #{rnn_forward.5} parent=0 // pred_check
    _
  $region11: #{rnn_forward.5} parent=0 // pred_check_branch
    %13 = sbr.rel (0) target = $region13
  $region12: #{rnn_forward.5} parent=0 // pred_region
    _
  $region13: #{rnn_forward.5} parent=0 // pred_fallthru
    _
  %v15 = vld [vmem:[%s0] sm:$0xf]
  %v16 = vld [vmem:[%s0 + $0x4] sm:$0xf]
  %v17 = vld [vmem:[%s0 + $0x8] sm:$0xf]
  %v18 = vld [vmem:[%s0 + $0xc] sm:$0xf]
  %v19 = vld [vmem:[%s0 + $0x10] sm:$0xf]
  %v20 = vld [vmem:[%s0 + $0x14] sm:$0xf]
  %v21 = vld [vmem:[%s0 + $0x18] sm:$0xf]
  %v22 = vld [vmem:[%s0 + $0x1c] sm:$0xf]
  %v23 = vld [vmem:[%s0 + $0x20] sm:$0xf]
  %v24 = vld [vmem:[%s1] sm:$0xf]
  %v25 = vld [vmem:[%s1 + $0x4] sm:$0xf]
  %v26 = vld [vmem:[%s2] sm:$0x1]
  %v28 = vperm.slane %v26, 0
  %v39 = vunpack.c.l.b16 %v15
  %v40 = vunpack.c.l.b16 %v16
  %v41 = vunpack.c.l.b16 %v17
  %v42 = vunpack.c.l.b16 %v18
  %v43 = vunpack.c.l.b16 %v19
  %v44 = vunpack.c.l.b16 %v20
  %v45 = vunpack.c.l.b16 %v21
  %v46 = vunpack.c.l.b16 %v22
  %v47 = vunpack.c.l.b16 %v23
  %v48 = vpack.c.b16 %v40, %v39
  %v49 = vpack.c.b16 %v42, %v41
  %v50 = vpack.c.b16 %v44, %v43
  %v51 = vpack.c.b16 %v46, %v45
  %v52 = vpack.c.b16 %v47, %v47
  %v55 = vunpack.c.l.b16 %v24
  %v56 = vunpack.c.l.b16 %v25
  %v57 = vpack.c.b16 %v56, %v55
  %vm59 = vcmask 130048
  %v61 = vsel %vm59, %v48, 0
  %v64 = vsel %vm59, %v49, 0
  %v67 = vsel %vm59, %v50, 0
  %v70 = vsel %vm59, %v51, 0
  %v73 = vsel %vm59, %v52, 0
  %75 = vmatpush.bf16.msra.mxu0 0
  %76 = vmatpush.bf16.msra.mxu0 0
  %77 = vmatpush.bf16.msra.mxu0 0
  %78 = vmatpush.bf16.msra.mxu0 0
  %79 = vmatpush.bf16.msra.mxu0 0
  %80 = vmatpush.bf16.msra.mxu0 0
  %81 = vmatpush.bf16.msra.mxu0 0
  %82 = vmatpush.bf16.msra.mxu0 %v57
  %83 = vmatmul.bf16.gmra.mxu0 %v61
  %v84 = vpop.f32.mrf.mxu0
  %v85 = vadd.f32 %v28, %v84
  %v86 = vpop.f32.mrf.mxu0
  %v87 = vadd.f32 %v28, %v86
  %88 = vmatmul.bf16.gmra.mxu0 %v64
  %v89 = vpop.f32.mrf.mxu0
  %v90 = vadd.f32 %v28, %v89
  %v91 = vpop.f32.mrf.mxu0
  %v92 = vadd.f32 %v28, %v91
  %93 = vmatmul.bf16.gmra.mxu0 %v67
  %v94 = vpop.f32.mrf.mxu0
  %v95 = vadd.f32 %v28, %v94
  %v96 = vpop.f32.mrf.mxu0
  %v97 = vadd.f32 %v28, %v96
  %98 = vmatmul.bf16.gmra.mxu0 %v70
  %v99 = vpop.f32.mrf.mxu0
  %v100 = vadd.f32 %v28, %v99
  %v101 = vpop.f32.mrf.mxu0
  %v102 = vadd.f32 %v28, %v101
  %103 = vmatmul.bf16.gmra.mxu0 %v73
  %v104 = vpop.f32.mrf.mxu0
  %v105 = vadd.f32 %v28, %v104
  %v106 = vpop.f32.mrf.mxu0
  %107 = vdwg.mxu0
  %108 = vst [vmem:[%s3] sm:$0xff] %v85
  %109 = vst [vmem:[%s3 + $0x8] sm:$0xff] %v87
  %110 = vst [vmem:[%s3 + $0x10] sm:$0xff] %v90
  %111 = vst [vmem:[%s3 + $0x18] sm:$0xff] %v92
  %112 = vst [vmem:[%s3 + $0x20] sm:$0xff] %v95
  %113 = vst [vmem:[%s3 + $0x28] sm:$0xff] %v97
  %114 = vst [vmem:[%s3 + $0x30] sm:$0xff] %v100
  %115 = vst [vmem:[%s3 + $0x38] sm:$0xff] %v102
  %116 = vst [vmem:[%s3 + $0x40] sm:$0xff] %v105
  // Predicated region
  $region14: #{rnn_forward.5} parent=0 // pred_check
    _
  $region15: #{rnn_forward.5} parent=0 // pred_check_branch
    %118 = sbr.rel (0) target = $region17
  $region16: #{rnn_forward.5} parent=0 // pred_region
    _
  $region17: #{rnn_forward.5} parent=0 // pred_fallthru
    _
  // Predicated region
  $region18: #{rnn_forward.5} parent=0 // pred_check
    _
  $region19: #{rnn_forward.5} parent=0 // pred_check_branch
    %120 = sbr.rel (0) target = $region21
  $region20: #{rnn_forward.5} parent=0 // pred_region
    _
  $region21: #{rnn_forward.5} parent=0 // pred_fallthru
    _

// kernel: rnn_forward.7
$region0: #{rnn_forward.7}
  #allocation0 [shape = 'u32[]', space=smem, size = 0x4, offset = 0x4, fixed_abs, tag = 'smem constant byte address 0x4 - core index']
  #allocation1 [shape = 'u32[72,128]{1,0:T(1,128)}', space=vmem, size = 0x9000, scoped, tag = 'internal scratch']
  %s0 = inlined_call_operand.vmem [shape: bf16[72,32], index: 0, kind: input, shape index: {}]
  %s1 = inlined_call_operand.vmem [shape: bf16[32,128], index: 1, kind: input, shape index: {}]
  %s2 = inlined_call_operand.vmem [shape: f32[1,128], index: 2, kind: input, shape index: {}]
  %s3 = inlined_call_operand.vmem [shape: f32[72,128], index: 3, kind: output, shape index: {}]
  %s4 = sld [smem:[#allocation0]]
  $region22: #{rnn_forward.7} parent=0
    _
  %s6 = ssub.s32 1, %s4
  %s7 = scalar_select 0, %s6, %s4
  // Predicated region
  $region2: #{rnn_forward.7} parent=0 // pred_check
    _
  $region3: #{rnn_forward.7} parent=0 // pred_check_branch
    %9 = sbr.rel (0) target = $region5
  $region4: #{rnn_forward.7} parent=0 // pred_region
    _
  $region5: #{rnn_forward.7} parent=0 // pred_fallthru
    _
  // Predicated region
  $region6: #{rnn_forward.7} parent=0 // pred_check
    _
  $region7: #{rnn_forward.7} parent=0 // pred_check_branch
    %11 = sbr.rel (0) target = $region9
  $region8: #{rnn_forward.7} parent=0 // pred_region
    _
  $region9: #{rnn_forward.7} parent=0 // pred_fallthru
    _
  // Predicated region
  $region10: #{rnn_forward.7} parent=0 // pred_check
    _
  $region11: #{rnn_forward.7} parent=0 // pred_check_branch
    %13 = sbr.rel (0) target = $region13
  $region12: #{rnn_forward.7} parent=0 // pred_region
    _
  $region13: #{rnn_forward.7} parent=0 // pred_fallthru
    _
  %v15 = vld [vmem:[%s0] sm:$0xf]
  %v16 = vld [vmem:[%s0 + $0x4] sm:$0xf]
  %v17 = vld [vmem:[%s0 + $0x8] sm:$0xf]
  %v18 = vld [vmem:[%s0 + $0xc] sm:$0xf]
  %v19 = vld [vmem:[%s0 + $0x10] sm:$0xf]
  %v20 = vld [vmem:[%s0 + $0x14] sm:$0xf]
  %v21 = vld [vmem:[%s0 + $0x18] sm:$0xf]
  %v22 = vld [vmem:[%s0 + $0x1c] sm:$0xf]
  %v23 = vld [vmem:[%s0 + $0x20] sm:$0xf]
  %v24 = vld [vmem:[%s1] sm:$0xf]
  %v25 = vld [vmem:[%s1 + $0x4] sm:$0xf]
  %v26 = vld [vmem:[%s1 + $0x8] sm:$0xf]
  %v27 = vld [vmem:[%s1 + $0xc] sm:$0xf]
  %v28 = vld [vmem:[%s2] sm:$0x1]
  %v30 = vperm.slane %v28, 0
  %v41 = vunpack.c.l.b16 %v15
  %v42 = vunpack.c.l.b16 %v16
  %v43 = vunpack.c.l.b16 %v17
  %v44 = vunpack.c.l.b16 %v18
  %v45 = vunpack.c.l.b16 %v19
  %v46 = vunpack.c.l.b16 %v20
  %v47 = vunpack.c.l.b16 %v21
  %v48 = vunpack.c.l.b16 %v22
  %v49 = vunpack.c.l.b16 %v23
  %v50 = vpack.c.b16 %v42, %v41
  %v51 = vpack.c.b16 %v44, %v43
  %v52 = vpack.c.b16 %v46, %v45
  %v53 = vpack.c.b16 %v48, %v47
  %v54 = vpack.c.b16 %v49, %v49
  %v59 = vunpack.c.l.b16 %v24
  %v60 = vunpack.c.l.b16 %v25
  %v61 = vunpack.c.l.b16 %v26
  %v62 = vunpack.c.l.b16 %v27
  %v63 = vpack.c.b16 %v60, %v59
  %v64 = vpack.c.b16 %v62, %v61
  %vm67 = vcmask 261120
  %v69 = vsel %vm67, %v50, 0
  %v72 = vsel %vm67, %v51, 0
  %v75 = vsel %vm67, %v52, 0
  %v78 = vsel %vm67, %v53, 0
  %v81 = vsel %vm67, %v54, 0
  %83 = vmatpush.bf16.msra.mxu0 0
  %84 = vmatpush.bf16.msra.mxu0 0
  %85 = vmatpush.bf16.msra.mxu0 0
  %86 = vmatpush.bf16.msra.mxu0 0
  %87 = vmatpush.bf16.msra.mxu0 0
  %88 = vmatpush.bf16.msra.mxu0 0
  %89 = vmatpush.bf16.msra.mxu0 %v64
  %90 = vmatpush.bf16.msra.mxu0 %v63
  %91 = vmatmul.bf16.gmra.mxu0 %v69
  %v92 = vpop.f32.mrf.mxu0
  %v93 = vadd.f32 %v30, %v92
  %v94 = vpop.f32.mrf.mxu0
  %v95 = vadd.f32 %v30, %v94
  %96 = vmatmul.bf16.gmra.mxu0 %v72
  %v97 = vpop.f32.mrf.mxu0
  %v98 = vadd.f32 %v30, %v97
  %v99 = vpop.f32.mrf.mxu0
  %v100 = vadd.f32 %v30, %v99
  %101 = vmatmul.bf16.gmra.mxu0 %v75
  %v102 = vpop.f32.mrf.mxu0
  %v103 = vadd.f32 %v30, %v102
  %v104 = vpop.f32.mrf.mxu0
  %v105 = vadd.f32 %v30, %v104
  %106 = vmatmul.bf16.gmra.mxu0 %v78
  %v107 = vpop.f32.mrf.mxu0
  %v108 = vadd.f32 %v30, %v107
  %v109 = vpop.f32.mrf.mxu0
  %v110 = vadd.f32 %v30, %v109
  %111 = vmatmul.bf16.gmra.mxu0 %v81
  %v112 = vpop.f32.mrf.mxu0
  %v113 = vadd.f32 %v30, %v112
  %v114 = vpop.f32.mrf.mxu0
  %115 = vdwg.mxu0
  %116 = vst [vmem:[%s3] sm:$0xff] %v93
  %117 = vst [vmem:[%s3 + $0x8] sm:$0xff] %v95
  %118 = vst [vmem:[%s3 + $0x10] sm:$0xff] %v98
  %119 = vst [vmem:[%s3 + $0x18] sm:$0xff] %v100
  %120 = vst [vmem:[%s3 + $0x20] sm:$0xff] %v103
  %121 = vst [vmem:[%s3 + $0x28] sm:$0xff] %v105
  %122 = vst [vmem:[%s3 + $0x30] sm:$0xff] %v108
  %123 = vst [vmem:[%s3 + $0x38] sm:$0xff] %v110
  %124 = vst [vmem:[%s3 + $0x40] sm:$0xff] %v113
  // Predicated region
  $region14: #{rnn_forward.7} parent=0 // pred_check
    _
  $region15: #{rnn_forward.7} parent=0 // pred_check_branch
    %126 = sbr.rel (0) target = $region17
  $region16: #{rnn_forward.7} parent=0 // pred_region
    _
  $region17: #{rnn_forward.7} parent=0 // pred_fallthru
    _
  // Predicated region
  $region18: #{rnn_forward.7} parent=0 // pred_check
    _
  $region19: #{rnn_forward.7} parent=0 // pred_check_branch
    %128 = sbr.rel (0) target = $region21
  $region20: #{rnn_forward.7} parent=0 // pred_region
    _
  $region21: #{rnn_forward.7} parent=0 // pred_fallthru
    _

// kernel: rnn_forward.6
$region0: #{rnn_forward.6}
  #allocation0 [shape = 'u32[]', space=smem, size = 0x4, offset = 0x4, fixed_abs, tag = 'smem constant byte address 0x4 - core index']
  #allocation1 [shape = 'u32[72,128]{1,0:T(1,128)}', space=vmem, size = 0x9000, scoped, tag = 'internal scratch']
  #allocation2 [shape = 'bf16[8,32]{1,0:T(8,128)(2,1)}', space=vmem, size = 0x800, scoped, tag = 'scratch operand']
  #allocation3 [shape = 'f32[8,32]{1,0:T(8,128)}', space=vmem, size = 0x1000, scoped, tag = 'scratch operand']
  %s0 = inlined_call_operand.vmem [shape: f32[9,8,128], index: 0, kind: input, shape index: {}]
  %s1 = inlined_call_operand.vmem [shape: bf16[32,128], index: 1, kind: input, shape index: {}]
  %s2 = inlined_call_operand.vmem [shape: bf16[9,8,32], index: 2, kind: output, shape index: {}]
  %s3 = sld [smem:[#allocation0]]
  $region22: #{rnn_forward.6} parent=0
    _
  %s5 = ssub.s32 1, %s3
  %s6 = scalar_select 0, %s5, %s3
  // Predicated region
  $region2: #{rnn_forward.6} parent=0 // pred_check
    _
  $region3: #{rnn_forward.6} parent=0 // pred_check_branch
    %8 = sbr.rel (0) target = $region5
  $region4: #{rnn_forward.6} parent=0 // pred_region
    _
  $region5: #{rnn_forward.6} parent=0 // pred_fallthru
    _
  // Predicated region
  $region6: #{rnn_forward.6} parent=0 // pred_check
    _
  $region7: #{rnn_forward.6} parent=0 // pred_check_branch
    %10 = sbr.rel (0) target = $region9
  $region8: #{rnn_forward.6} parent=0 // pred_region
    _
  $region9: #{rnn_forward.6} parent=0 // pred_fallthru
    _
  %p12 = scmp.eq.s32.totalorder 0, 0
  // Predicated region
  $region10: #{rnn_forward.6} parent=0 // pred_check
    %p13 = pneg %p12
  $region11: #{rnn_forward.6} parent=0 // pred_check_branch
    %15 = sbr.rel (%p13) target = $region13
  $region12: #{rnn_forward.6} parent=0 // pred_region
    %vm16 = vcmask 257024
    %17 = vst.msk [vmem:[#allocation2] sm:$0xf] %vm16, 0
    %vm18 = vcmask 261120
    %19 = vst.msk [vmem:[#allocation3] sm:$0xff] %vm18, 0.0
  $region13: #{rnn_forward.6} parent=0 // pred_fallthru
    _
  %v20 = vld [vmem:[%s0] sm:$0xff]
  %v21 = vld [vmem:[#allocation2] sm:$0xf]
  %v22 = vld [vmem:[%s1] sm:$0xf]
  %v23 = vld [vmem:[%s1 + $0x4] sm:$0xf]
  %v24 = vld [vmem:[%s1 + $0x8] sm:$0xf]
  %v25 = vld [vmem:[%s1 + $0xc] sm:$0xf]
  %v30 = vunpack.c.l.b16 %v22
  %v31 = vunpack.c.l.b16 %v23
  %v32 = vunpack.c.l.b16 %v24
  %v33 = vunpack.c.l.b16 %v25
  %v34 = vpack.c.b16 %v31, %v30
  %v35 = vpack.c.b16 %v33, %v32
  %vm38 = vcmask 261120
  %v40 = vsel %vm38, %v21, 0
  %42 = vmatpush.bf16.msra.mxu0 0
  %43 = vmatpush.bf16.msra.mxu0 0
  %44 = vmatpush.bf16.msra.mxu0 0
  %45 = vmatpush.bf16.msra.mxu0 0
  %46 = vmatpush.bf16.msra.mxu0 0
  %47 = vmatpush.bf16.msra.mxu0 0
  %48 = vmatpush.bf16.msra.mxu0 %v35
  %49 = vmatpush.bf16.msra.mxu0 %v34
  %50 = vmatmul.bf16.gmra.mxu0 %v40
  %v51 = vpop.f32.mrf.mxu0
  %v52 = vadd.f32 0.0, %v51
  %v53 = vpop.f32.mrf.mxu0
  %54 = vdwg.mxu0
  %v55 = vadd.f32 %v20, %v52
  %v56 = vmul.f32 %v55, 0.5
  %v57 = vtanh.pop %v56
  %v58 = vadd.f32 %v57, 1.0
  %v59 = vmul.f32 %v58, 0.5
  %v60 = vtanh.pop %v55
  %v61 = vld [vmem:[#allocation3] sm:$0xff]
  %63 = vrot.lane.b32.xlu0 %v61, 32
  %v64 = vpop.permute.xlu0 %63
  %v66 = vmul.f32 %v59, %v64
  %68 = vrot.lane.b32.xlu0 %v60, 64
  %v69 = vpop.permute.xlu0 %68
  %v71 = vmul.f32 %v59, %v69
  %73 = vrot.lane.b32.xlu0 %v71, 32
  %v74 = vpop.permute.xlu0 %73
  %v76 = vadd.f32 %v66, %v74
  %v77 = vtanh.pop %v76
  %79 = vrot.lane.b32.xlu0 %v77, 64
  %v80 = vpop.permute.xlu0 %79
  %v82 = vmul.f32 %v59, %v80
  %v83 = vpack.c.bf16 %v82, %v82
  %85 = vrot.lane.b32.xlu0 %v76, 96
  %v86 = vpop.permute.xlu0 %85
  %88 = vst.msk [vmem:[#allocation3] sm:$0xff] %vm38, %v86
  %90 = vrot.lane.b32.xlu0 %v83, 32
  %v91 = vpop.permute.xlu0 %90
  %vm93 = vcmask 257024
  %94 = vst.msk [vmem:[#allocation2] sm:$0xf] %vm93, %v91
  %95 = vst.msk [vmem:[%s2] sm:$0xf] %vm93, %v91
  %s96 = scalar_lea.vmem %s0, 8
  %v97 = vld [vmem:[%s96] sm:$0xff]
  %v98 = vld [vmem:[#allocation2] sm:$0xf]
  %v99 = vld [vmem:[%s1] sm:$0xf]
  %v100 = vld [vmem:[%s1 + $0x4] sm:$0xf]
  %v101 = vld [vmem:[%s1 + $0x8] sm:$0xf]
  %v102 = vld [vmem:[%s1 + $0xc] sm:$0xf]
  %v107 = vunpack.c.l.b16 %v99
  %v108 = vunpack.c.l.b16 %v100
  %v109 = vunpack.c.l.b16 %v101
  %v110 = vunpack.c.l.b16 %v102
  %v111 = vpack.c.b16 %v108, %v107
  %v112 = vpack.c.b16 %v110, %v109
  %v116 = vsel %vm38, %v98, 0
  %118 = vmatpush.bf16.msra.mxu0 0
  %119 = vmatpush.bf16.msra.mxu0 0
  %120 = vmatpush.bf16.msra.mxu0 0
  %121 = vmatpush.bf16.msra.mxu0 0
  %122 = vmatpush.bf16.msra.mxu0 0
  %123 = vmatpush.bf16.msra.mxu0 0
  %124 = vmatpush.bf16.msra.mxu0 %v112
  %125 = vmatpush.bf16.msra.mxu0 %v111
  %126 = vmatmul.bf16.gmra.mxu0 %v116
  %v127 = vpop.f32.mrf.mxu0
  %v128 = vadd.f32 0.0, %v127
  %v129 = vpop.f32.mrf.mxu0
  %130 = vdwg.mxu0
  %v131 = vadd.f32 %v97, %v128
  %v132 = vmul.f32 %v131, 0.5
  %v133 = vtanh.pop %v132
  %v134 = vadd.f32 %v133, 1.0
  %v135 = vmul.f32 %v134, 0.5
  %v136 = vtanh.pop %v131
  %v137 = vld [vmem:[#allocation3] sm:$0xff]
  %139 = vrot.lane.b32.xlu0 %v137, 32
  %v140 = vpop.permute.xlu0 %139
  %v142 = vmul.f32 %v135, %v140
  %144 = vrot.lane.b32.xlu0 %v136, 64
  %v145 = vpop.permute.xlu0 %144
  %v147 = vmul.f32 %v135, %v145
  %149 = vrot.lane.b32.xlu0 %v147, 32
  %v150 = vpop.permute.xlu0 %149
  %v152 = vadd.f32 %v142, %v150
  %v153 = vtanh.pop %v152
  %155 = vrot.lane.b32.xlu0 %v153, 64
  %v156 = vpop.permute.xlu0 %155
  %v158 = vmul.f32 %v135, %v156
  %v159 = vpack.c.bf16 %v158, %v158
  %161 = vrot.lane.b32.xlu0 %v152, 96
  %v162 = vpop.permute.xlu0 %161
  %164 = vst.msk [vmem:[#allocation3] sm:$0xff] %vm38, %v162
  %166 = vrot.lane.b32.xlu0 %v159, 32
  %v167 = vpop.permute.xlu0 %166
  %169 = vst.msk [vmem:[#allocation2] sm:$0xf] %vm93, %v167
  %s170 = scalar_lea.vmem %s2, 4
  %171 = vst.msk [vmem:[%s170] sm:$0xf] %vm93, %v167
  %s172 = scalar_lea.vmem %s0, 16
  %v173 = vld [vmem:[%s172] sm:$0xff]
  %v174 = vld [vmem:[#allocation2] sm:$0xf]
  %v175 = vld [vmem:[%s1] sm:$0xf]
  %v176 = vld [vmem:[%s1 + $0x4] sm:$0xf]
  %v177 = vld [vmem:[%s1 + $0x8] sm:$0xf]
  %v178 = vld [vmem:[%s1 + $0xc] sm:$0xf]
  %v183 = vunpack.c.l.b16 %v175
  %v184 = vunpack.c.l.b16 %v176
  %v185 = vunpack.c.l.b16 %v177
  %v186 = vunpack.c.l.b16 %v178
  %v187 = vpack.c.b16 %v184, %v183
  %v188 = vpack.c.b16 %v186, %v185
  %v192 = vsel %vm38, %v174, 0
  %194 = vmatpush.bf16.msra.mxu0 0
  %195 = vmatpush.bf16.msra.mxu0 0
  %196 = vmatpush.bf16.msra.mxu0 0
  %197 = vmatpush.bf16.msra.mxu0 0
  %198 = vmatpush.bf16.msra.mxu0 0
  %199 = vmatpush.bf16.msra.mxu0 0
  %200 = vmatpush.bf16.msra.mxu0 %v188
  %201 = vmatpush.bf16.msra.mxu0 %v187
  %202 = vmatmul.bf16.gmra.mxu0 %v192
  %v203 = vpop.f32.mrf.mxu0
  %v204 = vadd.f32 0.0, %v203
  %v205 = vpop.f32.mrf.mxu0
  %206 = vdwg.mxu0
  %v207 = vadd.f32 %v173, %v204
  %v208 = vmul.f32 %v207, 0.5
  %v209 = vtanh.pop %v208
  %v210 = vadd.f32 %v209, 1.0
  %v211 = vmul.f32 %v210, 0.5
  %v212 = vtanh.pop %v207
  %v213 = vld [vmem:[#allocation3] sm:$0xff]
  %215 = vrot.lane.b32.xlu0 %v213, 32
  %v216 = vpop.permute.xlu0 %215
  %v218 = vmul.f32 %v211, %v216
  %220 = vrot.lane.b32.xlu0 %v212, 64
  %v221 = vpop.permute.xlu0 %220
  %v223 = vmul.f32 %v211, %v221
  %225 = vrot.lane.b32.xlu0 %v223, 32
  %v226 = vpop.permute.xlu0 %225
  %v228 = vadd.f32 %v218, %v226
  %v229 = vtanh.pop %v228
  %231 = vrot.lane.b32.xlu0 %v229, 64
  %v232 = vpop.permute.xlu0 %231
  %v234 = vmul.f32 %v211, %v232
  %v235 = vpack.c.bf16 %v234, %v234
  %237 = vrot.lane.b32.xlu0 %v228, 96
  %v238 = vpop.permute.xlu0 %237
  %240 = vst.msk [vmem:[#allocation3] sm:$0xff] %vm38, %v238
  %242 = vrot.lane.b32.xlu0 %v235, 32
  %v243 = vpop.permute.xlu0 %242
  %245 = vst.msk [vmem:[#allocation2] sm:$0xf] %vm93, %v243
  %s246 = scalar_lea.vmem %s2, 8
  %247 = vst.msk [vmem:[%s246] sm:$0xf] %vm93, %v243
  %s248 = scalar_lea.vmem %s0, 24
  %v249 = vld [vmem:[%s248] sm:$0xff]
  %v250 = vld [vmem:[#allocation2] sm:$0xf]
  %v251 = vld [vmem:[%s1] sm:$0xf]
  %v252 = vld [vmem:[%s1 + $0x4] sm:$0xf]
  %v253 = vld [vmem:[%s1 + $0x8] sm:$0xf]
  %v254 = vld [vmem:[%s1 + $0xc] sm:$0xf]
  %v259 = vunpack.c.l.b16 %v251
  %v260 = vunpack.c.l.b16 %v252
  %v261 = vunpack.c.l.b16 %v253
  %v262 = vunpack.c.l.b16 %v254
  %v263 = vpack.c.b16 %v260, %v259
  %v264 = vpack.c.b16 %v262, %v261
  %v268 = vsel %vm38, %v250, 0
  %270 = vmatpush.bf16.msra.mxu0 0
  %271 = vmatpush.bf16.msra.mxu0 0
  %272 = vmatpush.bf16.msra.mxu0 0
  %273 = vmatpush.bf16.msra.mxu0 0
  %274 = vmatpush.bf16.msra.mxu0 0
  %275 = vmatpush.bf16.msra.mxu0 0
  %276 = vmatpush.bf16.msra.mxu0 %v264
  %277 = vmatpush.bf16.msra.mxu0 %v263
  %278 = vmatmul.bf16.gmra.mxu0 %v268
  %v279 = vpop.f32.mrf.mxu0
  %v280 = vadd.f32 0.0, %v279
  %v281 = vpop.f32.mrf.mxu0
  %282 = vdwg.mxu0
  %v283 = vadd.f32 %v249, %v280
  %v284 = vmul.f32 %v283, 0.5
  %v285 = vtanh.pop %v284
  %v286 = vadd.f32 %v285, 1.0
  %v287 = vmul.f32 %v286, 0.5
  %v288 = vtanh.pop %v283
  %v289 = vld [vmem:[#allocation3] sm:$0xff]
  %291 = vrot.lane.b32.xlu0 %v289, 32
  %v292 = vpop.permute.xlu0 %291
  %v294 = vmul.f32 %v287, %v292
  %296 = vrot.lane.b32.xlu0 %v288, 64
  %v297 = vpop.permute.xlu0 %296
  %v299 = vmul.f32 %v287, %v297
  %301 = vrot.lane.b32.xlu0 %v299, 32
  %v302 = vpop.permute.xlu0 %301
  %v304 = vadd.f32 %v294, %v302
  %v305 = vtanh.pop %v304
  %307 = vrot.lane.b32.xlu0 %v305, 64
  %v308 = vpop.permute.xlu0 %307
  %v310 = vmul.f32 %v287, %v308
  %v311 = vpack.c.bf16 %v310, %v310
  %313 = vrot.lane.b32.xlu0 %v304, 96
  %v314 = vpop.permute.xlu0 %313
  %316 = vst.msk [vmem:[#allocation3] sm:$0xff] %vm38, %v314
  %318 = vrot.lane.b32.xlu0 %v311, 32
  %v319 = vpop.permute.xlu0 %318
  %321 = vst.msk [vmem:[#allocation2] sm:$0xf] %vm93, %v319
  %s322 = scalar_lea.vmem %s2, 12
  %323 = vst.msk [vmem:[%s322] sm:$0xf] %vm93, %v319
  %s324 = scalar_lea.vmem %s0, 32
  %v325 = vld [vmem:[%s324] sm:$0xff]
  %v326 = vld [vmem:[#allocation2] sm:$0xf]
  %v327 = vld [vmem:[%s1] sm:$0xf]
  %v328 = vld [vmem:[%s1 + $0x4] sm:$0xf]
  %v329 = vld [vmem:[%s1 + $0x8] sm:$0xf]
  %v330 = vld [vmem:[%s1 + $0xc] sm:$0xf]
  %v335 = vunpack.c.l.b16 %v327
  %v336 = vunpack.c.l.b16 %v328
  %v337 = vunpack.c.l.b16 %v329
  %v338 = vunpack.c.l.b16 %v330
  %v339 = vpack.c.b16 %v336, %v335
  %v340 = vpack.c.b16 %v338, %v337
  %v344 = vsel %vm38, %v326, 0
  %346 = vmatpush.bf16.msra.mxu0 0
  %347 = vmatpush.bf16.msra.mxu0 0
  %348 = vmatpush.bf16.msra.mxu0 0
  %349 = vmatpush.bf16.msra.mxu0 0
  %350 = vmatpush.bf16.msra.mxu0 0
  %351 = vmatpush.bf16.msra.mxu0 0
  %352 = vmatpush.bf16.msra.mxu0 %v340
  %353 = vmatpush.bf16.msra.mxu0 %v339
  %354 = vmatmul.bf16.gmra.mxu0 %v344
  %v355 = vpop.f32.mrf.mxu0
  %v356 = vadd.f32 0.0, %v355
  %v357 = vpop.f32.mrf.mxu0
  %358 = vdwg.mxu0
  %v359 = vadd.f32 %v325, %v356
  %v360 = vmul.f32 %v359, 0.5
  %v361 = vtanh.pop %v360
  %v362 = vadd.f32 %v361, 1.0
  %v363 = vmul.f32 %v362, 0.5
  %v364 = vtanh.pop %v359
  %v365 = vld [vmem:[#allocation3] sm:$0xff]
  %367 = vrot.lane.b32.xlu0 %v365, 32
  %v368 = vpop.permute.xlu0 %367
  %v370 = vmul.f32 %v363, %v368
  %372 = vrot.lane.b32.xlu0 %v364, 64
  %v373 = vpop.permute.xlu0 %372
  %v375 = vmul.f32 %v363, %v373
  %377 = vrot.lane.b32.xlu0 %v375, 32
  %v378 = vpop.permute.xlu0 %377
  %v380 = vadd.f32 %v370, %v378
  %v381 = vtanh.pop %v380
  %383 = vrot.lane.b32.xlu0 %v381, 64
  %v384 = vpop.permute.xlu0 %383
  %v386 = vmul.f32 %v363, %v384
  %v387 = vpack.c.bf16 %v386, %v386
  %389 = vrot.lane.b32.xlu0 %v380, 96
  %v390 = vpop.permute.xlu0 %389
  %392 = vst.msk [vmem:[#allocation3] sm:$0xff] %vm38, %v390
  %394 = vrot.lane.b32.xlu0 %v387, 32
  %v395 = vpop.permute.xlu0 %394
  %397 = vst.msk [vmem:[#allocation2] sm:$0xf] %vm93, %v395
  %s398 = scalar_lea.vmem %s2, 16
  %399 = vst.msk [vmem:[%s398] sm:$0xf] %vm93, %v395
  %s400 = scalar_lea.vmem %s0, 40
  %v401 = vld [vmem:[%s400] sm:$0xff]
  %v402 = vld [vmem:[#allocation2] sm:$0xf]
  %v403 = vld [vmem:[%s1] sm:$0xf]
  %v404 = vld [vmem:[%s1 + $0x4] sm:$0xf]
  %v405 = vld [vmem:[%s1 + $0x8] sm:$0xf]
  %v406 = vld [vmem:[%s1 + $0xc] sm:$0xf]
  %v411 = vunpack.c.l.b16 %v403
  %v412 = vunpack.c.l.b16 %v404
  %v413 = vunpack.c.l.b16 %v405
  %v414 = vunpack.c.l.b16 %v406
  %v415 = vpack.c.b16 %v412, %v411
  %v416 = vpack.c.b16 %v414, %v413
  %v420 = vsel %vm38, %v402, 0
  %422 = vmatpush.bf16.msra.mxu0 0
  %423 = vmatpush.bf16.msra.mxu0 0
  %424 = vmatpush.bf16.msra.mxu0 0
  %425 = vmatpush.bf16.msra.mxu0 0
  %426 = vmatpush.bf16.msra.mxu0 0
  %427 = vmatpush.bf16.msra.mxu0 0
  %428 = vmatpush.bf16.msra.mxu0 %v416
  %429 = vmatpush.bf16.msra.mxu0 %v415
  %430 = vmatmul.bf16.gmra.mxu0 %v420
  %v431 = vpop.f32.mrf.mxu0
  %v432 = vadd.f32 0.0, %v431
  %v433 = vpop.f32.mrf.mxu0
  %434 = vdwg.mxu0
  %v435 = vadd.f32 %v401, %v432
  %v436 = vmul.f32 %v435, 0.5
  %v437 = vtanh.pop %v436
  %v438 = vadd.f32 %v437, 1.0
  %v439 = vmul.f32 %v438, 0.5
  %v440 = vtanh.pop %v435
  %v441 = vld [vmem:[#allocation3] sm:$0xff]
  %443 = vrot.lane.b32.xlu0 %v441, 32
  %v444 = vpop.permute.xlu0 %443
  %v446 = vmul.f32 %v439, %v444
  %448 = vrot.lane.b32.xlu0 %v440, 64
  %v449 = vpop.permute.xlu0 %448
  %v451 = vmul.f32 %v439, %v449
  %453 = vrot.lane.b32.xlu0 %v451, 32
  %v454 = vpop.permute.xlu0 %453
  %v456 = vadd.f32 %v446, %v454
  %v457 = vtanh.pop %v456
  %459 = vrot.lane.b32.xlu0 %v457, 64
  %v460 = vpop.permute.xlu0 %459
  %v462 = vmul.f32 %v439, %v460
  %v463 = vpack.c.bf16 %v462, %v462
  %465 = vrot.lane.b32.xlu0 %v456, 96
  %v466 = vpop.permute.xlu0 %465
  %468 = vst.msk [vmem:[#allocation3] sm:$0xff] %vm38, %v466
  %470 = vrot.lane.b32.xlu0 %v463, 32
  %v471 = vpop.permute.xlu0 %470
  %473 = vst.msk [vmem:[#allocation2] sm:$0xf] %vm93, %v471
  %s474 = scalar_lea.vmem %s2, 20
  %475 = vst.msk [vmem:[%s474] sm:$0xf] %vm93, %v471
  %s476 = scalar_lea.vmem %s0, 48
  %v477 = vld [vmem:[%s476] sm:$0xff]
  %v478 = vld [vmem:[#allocation2] sm:$0xf]
  %v479 = vld [vmem:[%s1] sm:$0xf]
  %v480 = vld [vmem:[%s1 + $0x4] sm:$0xf]
  %v481 = vld [vmem:[%s1 + $0x8] sm:$0xf]
  %v482 = vld [vmem:[%s1 + $0xc] sm:$0xf]
  %v487 = vunpack.c.l.b16 %v479
  %v488 = vunpack.c.l.b16 %v480
  %v489 = vunpack.c.l.b16 %v481
  %v490 = vunpack.c.l.b16 %v482
  %v491 = vpack.c.b16 %v488, %v487
  %v492 = vpack.c.b16 %v490, %v489
  %v496 = vsel %vm38, %v478, 0
  %498 = vmatpush.bf16.msra.mxu0 0
  %499 = vmatpush.bf16.msra.mxu0 0
  %500 = vmatpush.bf16.msra.mxu0 0
  %501 = vmatpush.bf16.msra.mxu0 0
  %502 = vmatpush.bf16.msra.mxu0 0
  %503 = vmatpush.bf16.msra.mxu0 0
  %504 = vmatpush.bf16.msra.mxu0 %v492
  %505 = vmatpush.bf16.msra.mxu0 %v491
  %506 = vmatmul.bf16.gmra.mxu0 %v496
  %v507 = vpop.f32.mrf.mxu0
  %v508 = vadd.f32 0.0, %v507
  %v509 = vpop.f32.mrf.mxu0
  %510 = vdwg.mxu0
  %v511 = vadd.f32 %v477, %v508
  %v512 = vmul.f32 %v511, 0.5
  %v513 = vtanh.pop %v512
  %v514 = vadd.f32 %v513, 1.0
  %v515 = vmul.f32 %v514, 0.5
  %v516 = vtanh.pop %v511
  %v517 = vld [vmem:[#allocation3] sm:$0xff]
  %519 = vrot.lane.b32.xlu0 %v517, 32
  %v520 = vpop.permute.xlu0 %519
  %v522 = vmul.f32 %v515, %v520
  %524 = vrot.lane.b32.xlu0 %v516, 64
  %v525 = vpop.permute.xlu0 %524
  %v527 = vmul.f32 %v515, %v525
  %529 = vrot.lane.b32.xlu0 %v527, 32
  %v530 = vpop.permute.xlu0 %529
  %v532 = vadd.f32 %v522, %v530
  %v533 = vtanh.pop %v532
  %535 = vrot.lane.b32.xlu0 %v533, 64
  %v536 = vpop.permute.xlu0 %535
  %v538 = vmul.f32 %v515, %v536
  %v539 = vpack.c.bf16 %v538, %v538
  %541 = vrot.lane.b32.xlu0 %v532, 96
  %v542 = vpop.permute.xlu0 %541
  %544 = vst.msk [vmem:[#allocation3] sm:$0xff] %vm38, %v542
  %546 = vrot.lane.b32.xlu0 %v539, 32
  %v547 = vpop.permute.xlu0 %546
  %549 = vst.msk [vmem:[#allocation2] sm:$0xf] %vm93, %v547
  %s550 = scalar_lea.vmem %s2, 24
  %551 = vst.msk [vmem:[%s550] sm:$0xf] %vm93, %v547
  %s552 = scalar_lea.vmem %s0, 56
  %v553 = vld [vmem:[%s552] sm:$0xff]
  %v554 = vld [vmem:[#allocation2] sm:$0xf]
  %v555 = vld [vmem:[%s1] sm:$0xf]
  %v556 = vld [vmem:[%s1 + $0x4] sm:$0xf]
  %v557 = vld [vmem:[%s1 + $0x8] sm:$0xf]
  %v558 = vld [vmem:[%s1 + $0xc] sm:$0xf]
  %v563 = vunpack.c.l.b16 %v555
  %v564 = vunpack.c.l.b16 %v556
  %v565 = vunpack.c.l.b16 %v557
  %v566 = vunpack.c.l.b16 %v558
  %v567 = vpack.c.b16 %v564, %v563
  %v568 = vpack.c.b16 %v566, %v565
  %v572 = vsel %vm38, %v554, 0
  %574 = vmatpush.bf16.msra.mxu0 0
  %575 = vmatpush.bf16.msra.mxu0 0
  %576 = vmatpush.bf16.msra.mxu0 0
  %577 = vmatpush.bf16.msra.mxu0 0
  %578 = vmatpush.bf16.msra.mxu0 0
  %579 = vmatpush.bf16.msra.mxu0 0
  %580 = vmatpush.bf16.msra.mxu0 %v568
  %581 = vmatpush.bf16.msra.mxu0 %v567
  %582 = vmatmul.bf16.gmra.mxu0 %v572
  %v583 = vpop.f32.mrf.mxu0
  %v584 = vadd.f32 0.0, %v583
  %v585 = vpop.f32.mrf.mxu0
  %586 = vdwg.mxu0
  %v587 = vadd.f32 %v553, %v584
  %v588 = vmul.f32 %v587, 0.5
  %v589 = vtanh.pop %v588
  %v590 = vadd.f32 %v589, 1.0
  %v591 = vmul.f32 %v590, 0.5
  %v592 = vtanh.pop %v587
  %v593 = vld [vmem:[#allocation3] sm:$0xff]
  %595 = vrot.lane.b32.xlu0 %v593, 32
  %v596 = vpop.permute.xlu0 %595
  %v598 = vmul.f32 %v591, %v596
  %600 = vrot.lane.b32.xlu0 %v592, 64
  %v601 = vpop.permute.xlu0 %600
  %v603 = vmul.f32 %v591, %v601
  %605 = vrot.lane.b32.xlu0 %v603, 32
  %v606 = vpop.permute.xlu0 %605
  %v608 = vadd.f32 %v598, %v606
  %v609 = vtanh.pop %v608
  %611 = vrot.lane.b32.xlu0 %v609, 64
  %v612 = vpop.permute.xlu0 %611
  %v614 = vmul.f32 %v591, %v612
  %v615 = vpack.c.bf16 %v614, %v614
  %617 = vrot.lane.b32.xlu0 %v608, 96
  %v618 = vpop.permute.xlu0 %617
  %620 = vst.msk [vmem:[#allocation3] sm:$0xff] %vm38, %v618
  %622 = vrot.lane.b32.xlu0 %v615, 32
  %v623 = vpop.permute.xlu0 %622
  %625 = vst.msk [vmem:[#allocation2] sm:$0xf] %vm93, %v623
  %s626 = scalar_lea.vmem %s2, 28
  %627 = vst.msk [vmem:[%s626] sm:$0xf] %vm93, %v623
  %s628 = scalar_lea.vmem %s0, 64
  %v629 = vld [vmem:[%s628] sm:$0xff]
  %v630 = vld [vmem:[#allocation2] sm:$0xf]
  %v631 = vld [vmem:[%s1] sm:$0xf]
  %v632 = vld [vmem:[%s1 + $0x4] sm:$0xf]
  %v633 = vld [vmem:[%s1 + $0x8] sm:$0xf]
  %v634 = vld [vmem:[%s1 + $0xc] sm:$0xf]
  %v639 = vunpack.c.l.b16 %v631
  %v640 = vunpack.c.l.b16 %v632
  %v641 = vunpack.c.l.b16 %v633
  %v642 = vunpack.c.l.b16 %v634
  %v643 = vpack.c.b16 %v640, %v639
  %v644 = vpack.c.b16 %v642, %v641
  %v648 = vsel %vm38, %v630, 0
  %650 = vmatpush.bf16.msra.mxu0 0
  %651 = vmatpush.bf16.msra.mxu0 0
  %652 = vmatpush.bf16.msra.mxu0 0
  %653 = vmatpush.bf16.msra.mxu0 0
  %654 = vmatpush.bf16.msra.mxu0 0
  %655 = vmatpush.bf16.msra.mxu0 0
  %656 = vmatpush.bf16.msra.mxu0 %v644
  %657 = vmatpush.bf16.msra.mxu0 %v643
  %658 = vmatmul.bf16.gmra.mxu0 %v648
  %v659 = vpop.f32.mrf.mxu0
  %v660 = vadd.f32 0.0, %v659
  %v661 = vpop.f32.mrf.mxu0
  %662 = vdwg.mxu0
  %v663 = vadd.f32 %v629, %v660
  %v664 = vmul.f32 %v663, 0.5
  %v665 = vtanh.pop %v664
  %v666 = vadd.f32 %v665, 1.0
  %v667 = vmul.f32 %v666, 0.5
  %v668 = vtanh.pop %v663
  %v669 = vld [vmem:[#allocation3] sm:$0xff]
  %671 = vrot.lane.b32.xlu0 %v669, 32
  %v672 = vpop.permute.xlu0 %671
  %v674 = vmul.f32 %v667, %v672
  %676 = vrot.lane.b32.xlu0 %v668, 64
  %v677 = vpop.permute.xlu0 %676
  %v679 = vmul.f32 %v667, %v677
  %681 = vrot.lane.b32.xlu0 %v679, 32
  %v682 = vpop.permute.xlu0 %681
  %v684 = vadd.f32 %v674, %v682
  %v685 = vtanh.pop %v684
  %687 = vrot.lane.b32.xlu0 %v685, 64
  %v688 = vpop.permute.xlu0 %687
  %v690 = vmul.f32 %v667, %v688
  %v691 = vpack.c.bf16 %v690, %v690
  %693 = vrot.lane.b32.xlu0 %v684, 96
  %v694 = vpop.permute.xlu0 %693
  %696 = vst.msk [vmem:[#allocation3] sm:$0xff] %vm38, %v694
  %698 = vrot.lane.b32.xlu0 %v691, 32
  %v699 = vpop.permute.xlu0 %698
  %701 = vst.msk [vmem:[#allocation2] sm:$0xf] %vm93, %v699
  %s702 = scalar_lea.vmem %s2, 32
  %703 = vst.msk [vmem:[%s702] sm:$0xf] %vm93, %v699
  // Predicated region
  $region14: #{rnn_forward.6} parent=0 // pred_check
    _
  $region15: #{rnn_forward.6} parent=0 // pred_check_branch
    %705 = sbr.rel (0) target = $region17
  $region16: #{rnn_forward.6} parent=0 // pred_region
    _
  $region17: #{rnn_forward.6} parent=0 // pred_fallthru
    _
  // Predicated region
  $region18: #{rnn_forward.6} parent=0 // pred_check
    _
  $region19: #{rnn_forward.6} parent=0 // pred_check_branch
    %707 = sbr.rel (0) target = $region21
  $region20: #{rnn_forward.6} parent=0 // pred_region
    _
  $region21: #{rnn_forward.6} parent=0 // pred_fallthru
    _

</llo_original>
